<compile_context>
chip_gen: v5e
topology: v5e:2x2
jax: 0.10.0
libtpu: 0.0.40
codegen_flags: <defaults>
</compile_context>

<pallas_src>
import functools

import numpy as np
import jax
import jax.numpy as jnp
from jax import lax
from jax.experimental import pallas as pl
from jax.experimental.pallas import tpu as pltpu


# ------------------------------- Pallas kernel -------------------------------

def _g_hypernet_kernel(x_ref, core_loc_ref, dvi_ref, w_ref, aff_ref, out_ref,
                       *, k_plus_1):
    # x:        (C, T)  channel-major node features (T = B*N in the lane dim)
    # core_loc: (T, T)  precomputed  Hl De_l^-1 Hl^T   (input-independent)
    # dvi:      (1, T)  precomputed  Dv^-1/2,  Dv = (k+1) + local row-sum
    # w:        (C, C)  Linear.weight (out, in)
    # aff:      (C, 4)  packed [bias | bn_gamma | bn_beta | pad]
    # out:      (C, T)  lane-dense output
    T = out_ref.shape[1]

    x = x_ref[...].astype(jnp.float32)

    # --- pairwise scores: s[i,j] = 2<x_i,x_j> - |x_j|^2  (negated squared
    #     distance up to a row-constant |x_i|^2, which cannot change the
    #     per-row top-k ordering).  Larger == closer.
    x_nm = jnp.transpose(x)                                        # (T, C)
    inner = jnp.dot(x_nm, x, preferred_element_type=jnp.float32)   # (T, T)
    sq = jnp.sum(x * x, axis=0, keepdims=True)                     # (1, T)
    scores = 2.0 * inner - sq

    # --- in-kernel top-(k+1): K passes of row-max, deterministic min-index
    #     tie-break, one-hot accumulate, mask.  Replaces the separate distance
    #     kernel + XLA lax.top_k + iota-compare incidence build of v2.
    col_ids = lax.broadcasted_iota(jnp.int32, (T, T), 1)
    s = scores
    hit = None
    for _ in range(k_plus_1):                     # k_plus_1 is small & static
        row_max = jnp.max(s, axis=1, keepdims=True)                # (T, 1)
        cand = jnp.where(s == row_max, col_ids, T)                 # (T, T) i32
        sel = jnp.min(cand, axis=1, keepdims=True)                 # (T, 1)
        onehot = col_ids == sel                                    # (T, T) bool
        hit = onehot if hit is None else jnp.logical_or(hit, onehot)
        s = jnp.where(onehot, -jnp.inf, s)
    h_knn = hit.astype(jnp.float32)               # exactly k+1 ones per row

    # --- core = H_knn De^-1 H_knn^T + core_loc  (the kNN and local column
    #     blocks of H = [H_knn | H_local] are disjoint, so the sum splits and
    #     the local part is the precomputed constant core_loc).
    de = jnp.maximum(jnp.sum(h_knn, axis=0, keepdims=True), 1e-8)  # (1, T)
    h_scaled = h_knn * (1.0 / de)                 # exact divide (one row vreg)
    # TODO(synk): building H_knn^T directly inside the selection loop would
    # avoid this 128x128 XLU transpose feeding the MXU; negligible at T=128.
    core = jnp.dot(h_scaled, jnp.transpose(h_knn),
                   preferred_element_type=jnp.float32)
    core = core + core_loc_ref[...]

    # --- HGNN layer, channel-major so every store is a full 128-lane vst.
    #     G = Ds core Ds is symmetric, so z_cm = y_cm @ G = ((y*d) @ core) * d.
    bias = aff_ref[:, 0:1]
    gamma = aff_ref[:, 1:2]
    beta = aff_ref[:, 2:3]
    d = dvi_ref[...]                                               # (1, T)
    y = jnp.dot(w_ref[...], x, preferred_element_type=jnp.float32) + bias
    z = jnp.dot(y * d, core, preferred_element_type=jnp.float32) * d
    # BatchNorm1d (training mode): per-channel batch stats over all T nodes.
    mean = jnp.mean(z, axis=1, keepdims=True)
    var = jnp.mean((z - mean) ** 2, axis=1, keepdims=True)         # biased var
    zn = (z - mean) * lax.rsqrt(var + 1e-5) * gamma + beta
    out_ref[...] = jnp.maximum(zn, 0.0) + x                  # relu + residual


# ---------------------------- pallas_call wrapper ----------------------------

def _full_spec(shape):
    # whole-array VMEM block (single grid step; shapes are small here).
    # NOTE: for larger T the (T,T) operands must be tiled instead (see header).
    return pl.BlockSpec(shape, lambda *_: (0,) * len(shape))


def g_hypernet_pallas(x_cm, core_loc, dv_isqrt, w, affine, *, k):
    C, T = x_cm.shape
    K = k + 1
    flops = (2 * T * T * C            # Gram matrix
             + 2 * T * T * T          # core matmul
             + 2 * C * C * T          # linear
             + 2 * C * T * T          # z = (y*d) @ core
             + (5 * K + 16) * T * T)  # selection + elementwise
    bytes_accessed = 4 * (2 * C * T + T * T + T + C * C + 4 * C)
    kernel = functools.partial(_g_hypernet_kernel, k_plus_1=K)
    return pl.pallas_call(
        kernel,
        out_shape=jax.ShapeDtypeStruct((C, T), jnp.float32),
        grid=(1,),
        in_specs=[_full_spec((C, T)), _full_spec((T, T)), _full_spec((1, T)),
                  _full_spec((C, C)), _full_spec((C, 4))],
        out_specs=_full_spec((C, T)),
        compiler_params=pltpu.CompilerParams(
            dimension_semantics=("arbitrary",),
            vmem_limit_bytes=32 * 1024 * 1024),
        cost_estimate=pl.CostEstimate(flops=flops, transcendentals=T + 2 * C,
                                      bytes_accessed=bytes_accessed),
    )(x_cm, core_loc, dv_isqrt, w, affine)


# ------------------------- host-side constant builders -----------------------

def local_kernel(size, kernel_size=3, stride=1):
    # replicates the torch F.unfold-based single_local_H: (size*size, n_edges)
    idx = np.arange(size * size).reshape(size, size)
    patches = []
    for i in range(0, size - kernel_size + 1, stride):
        for j in range(0, size - kernel_size + 1, stride):
            patches.append(idx[i:i + kernel_size, j:j + kernel_size].reshape(-1))
    inp_unf = np.stack(patches, axis=0)                           # (edge, k*k)
    edge = inp_unf.shape[0]
    h_local = np.zeros((size * size, edge), dtype=np.float32)
    for e in range(edge):
        h_local[inp_unf[e], e] = 1.0
    return h_local


def build_hypergraph_constants(single_local_h, batch, k):
    """Input-independent pieces of G, precomputed once at param-build time.

    core_loc = Hl De_l^-1 Hl^T  (block-diagonal local hyperedges) and
    Dv^-1/2 with Dv = (k+1) + local row-sum: every kNN row has exactly k+1
    ones (top-k indices are distinct, weights are 1), so Dv never depends on
    the input and the reference's new_H rebuild (max_k = int(Dv.max()) = k+1)
    is the identity.
    """
    n, e = single_local_h.shape
    t = batch * n
    lh = np.zeros((t, batch * e), dtype=np.float32)
    for i in range(batch):
        lh[i * n:(i + 1) * n, i * e:(i + 1) * e] = single_local_h
    de_loc = np.maximum(lh.sum(axis=0), 1e-8)                     # torch clamp
    core_loc = (lh * (1.0 / de_loc)) @ lh.T                       # (T, T)
    dv = (k + 1) + lh.sum(axis=1)                                 # (T,)
    dv_isqrt = dv ** -0.5                                         # unclamped, as in torch
    return (jnp.asarray(core_loc, jnp.float32),
            jnp.asarray(dv_isqrt.reshape(1, t), jnp.float32))


# --------------------------------- forward -----------------------------------

@functools.partial(jax.jit, static_argnames=("k",))
def g_hypernet_forward(x_nchw, params, k):
    b, c, w, h = x_nchw.shape
    n = w * h
    t = b * n
    # NCHW -> channel-major merged nodes (C, T); node order matches the
    # reference's  x.view(b, c, -1).permute(0, 2, 1).reshape(b*n, c).
    x_cm = jnp.transpose(x_nchw.reshape(b, c, n).astype(jnp.float32),
                         (1, 0, 2)).reshape(c, t)
    out_cm = g_hypernet_pallas(x_cm, params["core_loc"], params["dv_isqrt"],
                               params["w"], params["affine"], k=k)
    return jnp.transpose(out_cm.reshape(c, b, n), (1, 0, 2)).reshape(b, c, w, h)


# ----------------------------------- main ------------------------------------

if __name__ == "__main__":
    # small shapes consistent with the module: node=8 -> 8x8 spatial, T=128
    B, C, W, H = 2, 16, 8, 8
    node, kernel_size, stride = W, 3, 1
    K_neigs = [4]

    key = jax.random.PRNGKey(0)
    kx, kw, kb = jax.random.split(key, 3)
    x = jax.random.normal(kx, (B, C, W, H), dtype=jnp.float32)

    # deterministic parameter init (synthetic, not a checkpoint)
    lin_w = 0.1 * jax.random.normal(kw, (C, C), dtype=jnp.float32)   # (out, in)
    lin_b = 0.05 * jax.random.normal(kb, (C,), dtype=jnp.float32)
    affine = jnp.stack([lin_b,
                        jnp.ones((C,), jnp.float32),    # BatchNorm1d weight init
                        jnp.zeros((C,), jnp.float32),   # BatchNorm1d bias init
                        jnp.zeros((C,), jnp.float32)], axis=1)        # (C, 4)

    single_local_h = local_kernel(node, kernel_size=kernel_size, stride=stride)
    core_loc, dv_isqrt = build_hypergraph_constants(single_local_h, B, K_neigs[0])
    params = {"w": lin_w, "affine": affine,
              "core_loc": core_loc, "dv_isqrt": dv_isqrt}

    out = g_hypernet_forward(x, params, k=K_neigs[0])
    out = jax.block_until_ready(out)
    assert out.shape == (B, C, W, H)
    assert bool(jnp.all(jnp.isfinite(out)))
    print("KERNEL_OK")
</pallas_src>

<mosaic_0001>
module attributes {stable_mosaic.version = 11 : i64} {
  func.func @_g_hypernet_kernel(%arg0: i32, %arg1: memref<16x128xf32, #tpu.memory_space<vmem>>, %arg2: memref<128x128xf32, #tpu.memory_space<vmem>>, %arg3: memref<1x128xf32, #tpu.memory_space<vmem>>, %arg4: memref<16x16xf32, #tpu.memory_space<vmem>>, %arg5: memref<16x4xf32, #tpu.memory_space<vmem>>, %arg6: memref<16x128xf32, #tpu.memory_space<vmem>>) attributes {dimension_semantics = [#tpu.dimension_semantics<arbitrary>], iteration_bounds = array<i64: 1>, scalar_prefetch = 0 : i64, scratch_operands = 0 : i64, tpu.core_type = #tpu.core_type<tc>, window_params = [{pipeline_mode = #tpu.pipeline_mode<synchronous>, transform_indices = @transform_0, window_bounds = array<i64: 16, 128>}, {pipeline_mode = #tpu.pipeline_mode<synchronous>, transform_indices = @transform_1, window_bounds = array<i64: 128, 128>}, {pipeline_mode = #tpu.pipeline_mode<synchronous>, transform_indices = @transform_2, window_bounds = array<i64: 1, 128>}, {pipeline_mode = #tpu.pipeline_mode<synchronous>, transform_indices = @transform_3, window_bounds = array<i64: 16, 16>}, {pipeline_mode = #tpu.pipeline_mode<synchronous>, transform_indices = @transform_4, window_bounds = array<i64: 16, 4>}, {pipeline_mode = #tpu.pipeline_mode<synchronous>, transform_indices = @transform_5, window_bounds = array<i64: 16, 128>}]} {
    %c0 = arith.constant 0 : index
    %c0_0 = arith.constant 0 : index
    %0 = vector.load %arg1[%c0, %c0_0] : memref<16x128xf32, #tpu.memory_space<vmem>>, vector<16x128xf32>
    %1 = tpu.transpose %0, [1, 0] : vector<16x128xf32> -> vector<128x16xf32>
    %cst = arith.constant dense<0.000000e+00> : vector<128x128xf32>
    %2 = tpu.matmul %1, %0, %cst {dimension_numbers = #tpu.dot_dimension_numbers<[1], [0], [0], [1], [0, 0, 1, 1], [], []>} : vector<128x16xf32>, vector<16x128xf32>, vector<128x128xf32> -> vector<128x128xf32>
    %3 = arith.mulf %0, %0 : vector<16x128xf32>
    %cst_1 = arith.constant dense<0.000000e+00> : vector<128xf32>
    %4 = vector.multi_reduction <add>, %3, %cst_1 [0] : vector<16x128xf32> to vector<128xf32>
    %5 = vector.shape_cast %4 : vector<128xf32> to vector<1x128xf32>
    %cst_2 = arith.constant 2.000000e+00 : f32
    %6 = vector.broadcast %cst_2 : f32 to vector<128x128xf32>
    %7 = arith.mulf %6, %2 : vector<128x128xf32>
    %8 = vector.broadcast %5 : vector<1x128xf32> to vector<128x128xf32>
    %9 = arith.subf %7, %8 : vector<128x128xf32>
    %10 = tpu.iota {dimensions = array<i32: 1>} : vector<128x128xi32>
    %cst_3 = arith.constant dense<0xFF800000> : vector<128xf32>
    %11 = vector.multi_reduction <maximumf>, %9, %cst_3 [1] : vector<128x128xf32> to vector<128xf32>
    %12 = vector.shape_cast %11 : vector<128xf32> to vector<128x1xf32>
    %13 = vector.broadcast %12 : vector<128x1xf32> to vector<128x128xf32>
    %14 = arith.cmpf oeq, %9, %13 : vector<128x128xf32>
    %c128_i32 = arith.constant 128 : i32
    %15 = vector.broadcast %c128_i32 : i32 to vector<128x128xi32>
    %16 = arith.select %14, %10, %15 : vector<128x128xi1>, vector<128x128xi32>
    %cst_4 = arith.constant dense<2147483647> : vector<128xi32>
    %17 = vector.multi_reduction <minsi>, %16, %cst_4 [1] : vector<128x128xi32> to vector<128xi32>
    %18 = vector.shape_cast %17 : vector<128xi32> to vector<128x1xi32>
    %19 = vector.broadcast %18 : vector<128x1xi32> to vector<128x128xi32>
    %20 = arith.cmpi eq, %10, %19 : vector<128x128xi32>
    %cst_5 = arith.constant 0xFF800000 : f32
    %21 = vector.broadcast %cst_5 : f32 to vector<128x128xf32>
    %22 = arith.select %20, %21, %9 : vector<128x128xi1>, vector<128x128xf32>
    %cst_6 = arith.constant dense<0xFF800000> : vector<128xf32>
    %23 = vector.multi_reduction <maximumf>, %22, %cst_6 [1] : vector<128x128xf32> to vector<128xf32>
    %24 = vector.shape_cast %23 : vector<128xf32> to vector<128x1xf32>
    %25 = vector.broadcast %24 : vector<128x1xf32> to vector<128x128xf32>
    %26 = arith.cmpf oeq, %22, %25 : vector<128x128xf32>
    %c128_i32_7 = arith.constant 128 : i32
    %27 = vector.broadcast %c128_i32_7 : i32 to vector<128x128xi32>
    %28 = arith.select %26, %10, %27 : vector<128x128xi1>, vector<128x128xi32>
    %cst_8 = arith.constant dense<2147483647> : vector<128xi32>
    %29 = vector.multi_reduction <minsi>, %28, %cst_8 [1] : vector<128x128xi32> to vector<128xi32>
    %30 = vector.shape_cast %29 : vector<128xi32> to vector<128x1xi32>
    %31 = vector.broadcast %30 : vector<128x1xi32> to vector<128x128xi32>
    %32 = arith.cmpi eq, %10, %31 : vector<128x128xi32>
    %33 = arith.ori %20, %32 : vector<128x128xi1>
    %cst_9 = arith.constant 0xFF800000 : f32
    %34 = vector.broadcast %cst_9 : f32 to vector<128x128xf32>
    %35 = arith.select %32, %34, %22 : vector<128x128xi1>, vector<128x128xf32>
    %cst_10 = arith.constant dense<0xFF800000> : vector<128xf32>
    %36 = vector.multi_reduction <maximumf>, %35, %cst_10 [1] : vector<128x128xf32> to vector<128xf32>
    %37 = vector.shape_cast %36 : vector<128xf32> to vector<128x1xf32>
    %38 = vector.broadcast %37 : vector<128x1xf32> to vector<128x128xf32>
    %39 = arith.cmpf oeq, %35, %38 : vector<128x128xf32>
    %c128_i32_11 = arith.constant 128 : i32
    %40 = vector.broadcast %c128_i32_11 : i32 to vector<128x128xi32>
    %41 = arith.select %39, %10, %40 : vector<128x128xi1>, vector<128x128xi32>
    %cst_12 = arith.constant dense<2147483647> : vector<128xi32>
    %42 = vector.multi_reduction <minsi>, %41, %cst_12 [1] : vector<128x128xi32> to vector<128xi32>
    %43 = vector.shape_cast %42 : vector<128xi32> to vector<128x1xi32>
    %44 = vector.broadcast %43 : vector<128x1xi32> to vector<128x128xi32>
    %45 = arith.cmpi eq, %10, %44 : vector<128x128xi32>
    %46 = arith.ori %33, %45 : vector<128x128xi1>
    %cst_13 = arith.constant 0xFF800000 : f32
    %47 = vector.broadcast %cst_13 : f32 to vector<128x128xf32>
    %48 = arith.select %45, %47, %35 : vector<128x128xi1>, vector<128x128xf32>
    %cst_14 = arith.constant dense<0xFF800000> : vector<128xf32>
    %49 = vector.multi_reduction <maximumf>, %48, %cst_14 [1] : vector<128x128xf32> to vector<128xf32>
    %50 = vector.shape_cast %49 : vector<128xf32> to vector<128x1xf32>
    %51 = vector.broadcast %50 : vector<128x1xf32> to vector<128x128xf32>
    %52 = arith.cmpf oeq, %48, %51 : vector<128x128xf32>
    %c128_i32_15 = arith.constant 128 : i32
    %53 = vector.broadcast %c128_i32_15 : i32 to vector<128x128xi32>
    %54 = arith.select %52, %10, %53 : vector<128x128xi1>, vector<128x128xi32>
    %cst_16 = arith.constant dense<2147483647> : vector<128xi32>
    %55 = vector.multi_reduction <minsi>, %54, %cst_16 [1] : vector<128x128xi32> to vector<128xi32>
    %56 = vector.shape_cast %55 : vector<128xi32> to vector<128x1xi32>
    %57 = vector.broadcast %56 : vector<128x1xi32> to vector<128x128xi32>
    %58 = arith.cmpi eq, %10, %57 : vector<128x128xi32>
    %59 = arith.ori %46, %58 : vector<128x128xi1>
    %cst_17 = arith.constant 0xFF800000 : f32
    %60 = vector.broadcast %cst_17 : f32 to vector<128x128xf32>
    %61 = arith.select %58, %60, %48 : vector<128x128xi1>, vector<128x128xf32>
    %cst_18 = arith.constant dense<0xFF800000> : vector<128xf32>
    %62 = vector.multi_reduction <maximumf>, %61, %cst_18 [1] : vector<128x128xf32> to vector<128xf32>
    %63 = vector.shape_cast %62 : vector<128xf32> to vector<128x1xf32>
    %64 = vector.broadcast %63 : vector<128x1xf32> to vector<128x128xf32>
    %65 = arith.cmpf oeq, %61, %64 : vector<128x128xf32>
    %c128_i32_19 = arith.constant 128 : i32
    %66 = vector.broadcast %c128_i32_19 : i32 to vector<128x128xi32>
    %67 = arith.select %65, %10, %66 : vector<128x128xi1>, vector<128x128xi32>
    %cst_20 = arith.constant dense<2147483647> : vector<128xi32>
    %68 = vector.multi_reduction <minsi>, %67, %cst_20 [1] : vector<128x128xi32> to vector<128xi32>
    %69 = vector.shape_cast %68 : vector<128xi32> to vector<128x1xi32>
    %70 = vector.broadcast %69 : vector<128x1xi32> to vector<128x128xi32>
    %71 = arith.cmpi eq, %10, %70 : vector<128x128xi32>
    %72 = arith.ori %59, %71 : vector<128x128xi1>
    %73 = arith.extui %72 : vector<128x128xi1> to vector<128x128xi32>
    %74 = arith.sitofp %73 : vector<128x128xi32> to vector<128x128xf32>
    %cst_21 = arith.constant dense<0.000000e+00> : vector<128xf32>
    %75 = vector.multi_reduction <add>, %74, %cst_21 [0] : vector<128x128xf32> to vector<128xf32>
    %76 = vector.shape_cast %75 : vector<128xf32> to vector<1x128xf32>
    %cst_22 = arith.constant 9.99999993E-9 : f32
    %77 = vector.broadcast %cst_22 : f32 to vector<1x128xf32>
    %78 = arith.maximumf %76, %77 : vector<1x128xf32>
    %cst_23 = arith.constant 1.000000e+00 : f32
    %79 = vector.broadcast %cst_23 : f32 to vector<1x128xf32>
    %80 = arith.divf %79, %78 : vector<1x128xf32>
    %81 = vector.broadcast %80 : vector<1x128xf32> to vector<128x128xf32>
    %82 = arith.mulf %74, %81 : vector<128x128xf32>
    %83 = tpu.transpose %74, [1, 0] : vector<128x128xf32> -> vector<128x128xf32>
    %cst_24 = arith.constant dense<0.000000e+00> : vector<128x128xf32>
    %84 = tpu.matmul %82, %83, %cst_24 {dimension_numbers = #tpu.dot_dimension_numbers<[1], [0], [0], [1], [0, 0, 1, 1], [], []>} : vector<128x128xf32>, vector<128x128xf32>, vector<128x128xf32> -> vector<128x128xf32>
    %c0_25 = arith.constant 0 : index
    %c0_26 = arith.constant 0 : index
    %85 = vector.load %arg2[%c0_25, %c0_26] : memref<128x128xf32, #tpu.memory_space<vmem>>, vector<128x128xf32>
    %86 = arith.addf %84, %85 : vector<128x128xf32>
    %c0_27 = arith.constant 0 : index
    %c0_28 = arith.constant 0 : index
    %87 = vector.load %arg5[%c0_27, %c0_28] : memref<16x4xf32, #tpu.memory_space<vmem>>, vector<16x1xf32>
    %c0_29 = arith.constant 0 : index
    %c1 = arith.constant 1 : index
    %88 = vector.load %arg5[%c0_29, %c1] : memref<16x4xf32, #tpu.memory_space<vmem>>, vector<16x1xf32>
    %c0_30 = arith.constant 0 : index
    %c2 = arith.constant 2 : index
    %89 = vector.load %arg5[%c0_30, %c2] : memref<16x4xf32, #tpu.memory_space<vmem>>, vector<16x1xf32>
    %c0_31 = arith.constant 0 : index
    %c0_32 = arith.constant 0 : index
    %90 = vector.load %arg3[%c0_31, %c0_32] : memref<1x128xf32, #tpu.memory_space<vmem>>, vector<1x128xf32>
    %c0_33 = arith.constant 0 : index
    %c0_34 = arith.constant 0 : index
    %91 = vector.load %arg4[%c0_33, %c0_34] : memref<16x16xf32, #tpu.memory_space<vmem>>, vector<16x16xf32>
    %cst_35 = arith.constant dense<0.000000e+00> : vector<16x128xf32>
    %92 = tpu.matmul %91, %0, %cst_35 {dimension_numbers = #tpu.dot_dimension_numbers<[1], [0], [0], [1], [0, 0, 1, 1], [], []>} : vector<16x16xf32>, vector<16x128xf32>, vector<16x128xf32> -> vector<16x128xf32>
    %93 = vector.broadcast %87 : vector<16x1xf32> to vector<16x128xf32>
    %94 = arith.addf %92, %93 : vector<16x128xf32>
    %95 = vector.broadcast %90 : vector<1x128xf32> to vector<16x128xf32>
    %96 = arith.mulf %94, %95 : vector<16x128xf32>
    %cst_36 = arith.constant dense<0.000000e+00> : vector<16x128xf32>
    %97 = tpu.matmul %96, %86, %cst_36 {dimension_numbers = #tpu.dot_dimension_numbers<[1], [0], [0], [1], [0, 0, 1, 1], [], []>} : vector<16x128xf32>, vector<128x128xf32>, vector<16x128xf32> -> vector<16x128xf32>
    %98 = vector.broadcast %90 : vector<1x128xf32> to vector<16x128xf32>
    %99 = arith.mulf %97, %98 : vector<16x128xf32>
    %cst_37 = arith.constant dense<0.000000e+00> : vector<16xf32>
    %100 = vector.multi_reduction <add>, %99, %cst_37 [1] : vector<16x128xf32> to vector<16xf32>
    %101 = vector.shape_cast %100 : vector<16xf32> to vector<16x1xf32>
    %cst_38 = arith.constant 1.280000e+02 : f32
    %102 = vector.broadcast %cst_38 : f32 to vector<16x1xf32>
    %103 = arith.divf %101, %102 : vector<16x1xf32>
    %104 = vector.broadcast %103 : vector<16x1xf32> to vector<16x128xf32>
    %105 = arith.subf %99, %104 : vector<16x128xf32>
    %106 = arith.mulf %105, %105 : vector<16x128xf32>
    %cst_39 = arith.constant dense<0.000000e+00> : vector<16xf32>
    %107 = vector.multi_reduction <add>, %106, %cst_39 [1] : vector<16x128xf32> to vector<16xf32>
    %108 = vector.shape_cast %107 : vector<16xf32> to vector<16x1xf32>
    %cst_40 = arith.constant 1.280000e+02 : f32
    %109 = vector.broadcast %cst_40 : f32 to vector<16x1xf32>
    %110 = arith.divf %108, %109 : vector<16x1xf32>
    %111 = vector.broadcast %103 : vector<16x1xf32> to vector<16x128xf32>
    %112 = arith.subf %99, %111 : vector<16x128xf32>
    %cst_41 = arith.constant 9.99999974E-6 : f32
    %113 = vector.broadcast %cst_41 : f32 to vector<16x1xf32>
    %114 = arith.addf %110, %113 : vector<16x1xf32>
    %115 = math.rsqrt %114 : vector<16x1xf32>
    %116 = vector.broadcast %115 : vector<16x1xf32> to vector<16x128xf32>
    %117 = arith.mulf %112, %116 : vector<16x128xf32>
    %118 = vector.broadcast %88 : vector<16x1xf32> to vector<16x128xf32>
    %119 = arith.mulf %117, %118 : vector<16x128xf32>
    %120 = vector.broadcast %89 : vector<16x1xf32> to vector<16x128xf32>
    %121 = arith.addf %119, %120 : vector<16x128xf32>
    %cst_42 = arith.constant 0.000000e+00 : f32
    %122 = vector.broadcast %cst_42 : f32 to vector<16x128xf32>
    %123 = arith.maximumf %121, %122 : vector<16x128xf32>
    %124 = arith.addf %123, %0 : vector<16x128xf32>
    %c0_43 = arith.constant 0 : index
    %c0_44 = arith.constant 0 : index
    %125 = vector.load %arg6[%c0_43, %c0_44] : memref<16x128xf32, #tpu.memory_space<vmem>>, vector<16x128xf32>
    tpu.vector_store %arg6[%c0_43, %c0_44], %124 {strides = array<i32>} : memref<16x128xf32, #tpu.memory_space<vmem>>, vector<16x128xf32>,
    return
  }
  func.func @transform_0(%arg0: i32) -> (i32, i32) {
    %c0_i32 = arith.constant 0 : i32
    %c0_i32_0 = arith.constant 0 : i32
    %c0_i32_1 = arith.constant 0 : i32
    return %c0_i32, %c0_i32_0 : i32, i32
  }
  func.func @transform_1(%arg0: i32) -> (i32, i32) {
    %c0_i32 = arith.constant 0 : i32
    %c0_i32_0 = arith.constant 0 : i32
    %c0_i32_1 = arith.constant 0 : i32
    return %c0_i32, %c0_i32_0 : i32, i32
  }
  func.func @transform_2(%arg0: i32) -> (i32, i32) {
    %c0_i32 = arith.constant 0 : i32
    %c0_i32_0 = arith.constant 0 : i32
    %c0_i32_1 = arith.constant 0 : i32
    return %c0_i32, %c0_i32_0 : i32, i32
  }
  func.func @transform_3(%arg0: i32) -> (i32, i32) {
    %c0_i32 = arith.constant 0 : i32
    %c0_i32_0 = arith.constant 0 : i32
    %c0_i32_1 = arith.constant 0 : i32
    return %c0_i32, %c0_i32_0 : i32, i32
  }
  func.func @transform_4(%arg0: i32) -> (i32, i32) {
    %c0_i32 = arith.constant 0 : i32
    %c0_i32_0 = arith.constant 0 : i32
    %c0_i32_1 = arith.constant 0 : i32
    return %c0_i32, %c0_i32_0 : i32, i32
  }
  func.func @transform_5(%arg0: i32) -> (i32, i32) {
    %c0_i32 = arith.constant 0 : i32
    %c0_i32_0 = arith.constant 0 : i32
    %c0_i32_1 = arith.constant 0 : i32
    return %c0_i32, %c0_i32_0 : i32, i32
  }
}

</mosaic_0001>

<llo_original>
// kernel: g_hypernet_forward.1
$region0: #{g_hypernet_forward.1}
  #allocation0 [shape = 'u32[]', space=smem, size = 0x4, offset = 0x4, fixed_abs, tag = 'smem constant byte address 0x4 - core index']
  #allocation1 [shape = 'u32[72,128]{1,0:T(1,128)}', space=vmem, size = 0x9000, scoped, tag = 'internal scratch']
  %s0 = inlined_call_operand.vmem [shape: f32[16,128], index: 0, kind: input, shape index: {}]
  %s1 = inlined_call_operand.vmem [shape: f32[128,128], index: 1, kind: input, shape index: {}]
  %s2 = inlined_call_operand.vmem [shape: f32[1,128], index: 2, kind: input, shape index: {}]
  %s3 = inlined_call_operand.vmem [shape: f32[16,16], index: 3, kind: input, shape index: {}]
  %s4 = inlined_call_operand.vmem [shape: f32[16,4], index: 4, kind: input, shape index: {}]
  %s5 = inlined_call_operand.vmem [shape: f32[16,128], index: 5, kind: output, shape index: {}]
  %s6 = sld [smem:[#allocation0]]
  $region30: #{g_hypernet_forward.1} parent=0
    _
  %s8 = ssub.s32 1, %s6
  %s9 = scalar_select 0, %s8, %s6
  // Predicated region
  $region2: #{g_hypernet_forward.1} parent=0 // pred_check
    _
  $region3: #{g_hypernet_forward.1} parent=0 // pred_check_branch
    %11 = sbr.rel (0) target = $region5
  $region4: #{g_hypernet_forward.1} parent=0 // pred_region
    _
  $region5: #{g_hypernet_forward.1} parent=0 // pred_fallthru
    _
  // Predicated region
  $region6: #{g_hypernet_forward.1} parent=0 // pred_check
    _
  $region7: #{g_hypernet_forward.1} parent=0 // pred_check_branch
    %13 = sbr.rel (0) target = $region9
  $region8: #{g_hypernet_forward.1} parent=0 // pred_region
    _
  $region9: #{g_hypernet_forward.1} parent=0 // pred_fallthru
    _
  // Predicated region
  $region10: #{g_hypernet_forward.1} parent=0 // pred_check
    _
  $region11: #{g_hypernet_forward.1} parent=0 // pred_check_branch
    %15 = sbr.rel (0) target = $region13
  $region12: #{g_hypernet_forward.1} parent=0 // pred_region
    _
  $region13: #{g_hypernet_forward.1} parent=0 // pred_fallthru
    _
  // Predicated region
  $region14: #{g_hypernet_forward.1} parent=0 // pred_check
    _
  $region15: #{g_hypernet_forward.1} parent=0 // pred_check_branch
    %17 = sbr.rel (0) target = $region17
  $region16: #{g_hypernet_forward.1} parent=0 // pred_region
    _
  $region17: #{g_hypernet_forward.1} parent=0 // pred_fallthru
    _
  // Predicated region
  $region18: #{g_hypernet_forward.1} parent=0 // pred_check
    _
  $region19: #{g_hypernet_forward.1} parent=0 // pred_check_branch
    %19 = sbr.rel (0) target = $region21
  $region20: #{g_hypernet_forward.1} parent=0 // pred_region
    _
  $region21: #{g_hypernet_forward.1} parent=0 // pred_fallthru
    _
  %v20 = vld [vmem:[%s0] sm:$0xff]
  %v21 = vld [vmem:[%s0 + $0x8] sm:$0xff]
  %22 = vxpose.xlu0.b32.start [1/16] %v20, 128
  %23 = vxpose.xlu0.b32.cont [2/16] %v21, 128
  %24 = vxpose.xlu0.b32.cont [3/16] 0.0, 128
  %25 = vxpose.xlu0.b32.cont [4/16] 0.0, 128
  %26 = vxpose.xlu0.b32.cont [5/16] 0.0, 128
  %27 = vxpose.xlu0.b32.cont [6/16] 0.0, 128
  %28 = vxpose.xlu0.b32.cont [7/16] 0.0, 128
  %29 = vxpose.xlu0.b32.cont [8/16] 0.0, 128
  %30 = vxpose.xlu0.b32.cont [9/16] 0.0, 128
  %31 = vxpose.xlu0.b32.cont [10/16] 0.0, 128
  %32 = vxpose.xlu0.b32.cont [11/16] 0.0, 128
  %33 = vxpose.xlu0.b32.cont [12/16] 0.0, 128
  %34 = vxpose.xlu0.b32.cont [13/16] 0.0, 128
  %35 = vxpose.xlu0.b32.cont [14/16] 0.0, 128
  %36 = vxpose.xlu0.b32.cont [15/16] 0.0, 128
  %37 = vxpose.xlu0.b32.end [16/16] 0.0, 128
  %v38 = vpop.trf.xlu0
  %v39 = vpop.trf.xlu0
  %v40 = vpop.trf.xlu0
  %v41 = vpop.trf.xlu0
  %v42 = vpop.trf.xlu0
  %v43 = vpop.trf.xlu0
  %v44 = vpop.trf.xlu0
  %v45 = vpop.trf.xlu0
  %v46 = vpop.trf.xlu0
  %v47 = vpop.trf.xlu0
  %v48 = vpop.trf.xlu0
  %v49 = vpop.trf.xlu0
  %v50 = vpop.trf.xlu0
  %v51 = vpop.trf.xlu0
  %v52 = vpop.trf.xlu0
  %v53 = vpop.trf.xlu0
  %vm54 = vcmask 130048
  %v56 = vsel %vm54, %v38, 0
  %v59 = vsel %vm54, %v39, 0
  %v62 = vsel %vm54, %v40, 0
  %v65 = vsel %vm54, %v41, 0
  %v68 = vsel %vm54, %v42, 0
  %v71 = vsel %vm54, %v43, 0
  %v74 = vsel %vm54, %v44, 0
  %v77 = vsel %vm54, %v45, 0
  %v80 = vsel %vm54, %v46, 0
  %v83 = vsel %vm54, %v47, 0
  %v86 = vsel %vm54, %v48, 0
  %v89 = vsel %vm54, %v49, 0
  %v92 = vsel %vm54, %v50, 0
  %v95 = vsel %vm54, %v51, 0
  %v98 = vsel %vm54, %v52, 0
  %v101 = vsel %vm54, %v53, 0
  %103 = vmatpush.msra.mxu0 0.0
  %104 = vmatpush.msra.mxu0 0.0
  %105 = vmatpush.msra.mxu0 0.0
  %106 = vmatpush.msra.mxu0 0.0
  %107 = vmatpush.msra.mxu0 0.0
  %108 = vmatpush.msra.mxu0 0.0
  %109 = vmatpush.msra.mxu0 0.0
  %110 = vmatpush.msra.mxu0 0.0
  %111 = vmatpush.msra.mxu0 0.0
  %112 = vmatpush.msra.mxu0 0.0
  %113 = vmatpush.msra.mxu0 0.0
  %114 = vmatpush.msra.mxu0 0.0
  %115 = vmatpush.msra.mxu0 0.0
  %116 = vmatpush.msra.mxu0 0.0
  %117 = vmatpush.msra.mxu0 %v21
  %118 = vmatpush.msra.mxu0 %v20
  %119 = vmatmul.f32.gmra.mxu0 %v56
  %v120 = vpop.f32.mrf.mxu0
  %v121 = vadd.f32 0.0, %v120
  %122 = vmatmul.f32.gmra.mxu0 %v59
  %v123 = vpop.f32.mrf.mxu0
  %v124 = vadd.f32 0.0, %v123
  %125 = vmatmul.f32.gmra.mxu0 %v62
  %v126 = vpop.f32.mrf.mxu0
  %v127 = vadd.f32 0.0, %v126
  %128 = vmatmul.f32.gmra.mxu0 %v65
  %v129 = vpop.f32.mrf.mxu0
  %v130 = vadd.f32 0.0, %v129
  %131 = vmatmul.f32.gmra.mxu0 %v68
  %v132 = vpop.f32.mrf.mxu0
  %v133 = vadd.f32 0.0, %v132
  %134 = vmatmul.f32.gmra.mxu0 %v71
  %v135 = vpop.f32.mrf.mxu0
  %v136 = vadd.f32 0.0, %v135
  %137 = vmatmul.f32.gmra.mxu0 %v74
  %v138 = vpop.f32.mrf.mxu0
  %v139 = vadd.f32 0.0, %v138
  %140 = vmatmul.f32.gmra.mxu0 %v77
  %v141 = vpop.f32.mrf.mxu0
  %v142 = vadd.f32 0.0, %v141
  %143 = vmatmul.f32.gmra.mxu0 %v80
  %v144 = vpop.f32.mrf.mxu0
  %v145 = vadd.f32 0.0, %v144
  %146 = vmatmul.f32.gmra.mxu0 %v83
  %v147 = vpop.f32.mrf.mxu0
  %v148 = vadd.f32 0.0, %v147
  %149 = vmatmul.f32.gmra.mxu0 %v86
  %v150 = vpop.f32.mrf.mxu0
  %v151 = vadd.f32 0.0, %v150
  %152 = vmatmul.f32.gmra.mxu0 %v89
  %v153 = vpop.f32.mrf.mxu0
  %v154 = vadd.f32 0.0, %v153
  %155 = vmatmul.f32.gmra.mxu0 %v92
  %v156 = vpop.f32.mrf.mxu0
  %v157 = vadd.f32 0.0, %v156
  %158 = vmatmul.f32.gmra.mxu0 %v95
  %v159 = vpop.f32.mrf.mxu0
  %v160 = vadd.f32 0.0, %v159
  %161 = vmatmul.f32.gmra.mxu0 %v98
  %v162 = vpop.f32.mrf.mxu0
  %v163 = vadd.f32 0.0, %v162
  %164 = vmatmul.f32.gmra.mxu0 %v101
  %v165 = vpop.f32.mrf.mxu0
  %v166 = vadd.f32 0.0, %v165
  %167 = vdwg.mxu0
  %v168 = vmul.f32 %v20, %v20
  %v169 = vmul.f32 %v21, %v21
  %v170 = vadd.f32 %v168, %v169
  %v171 = vrot.slane %v170, 4
  %v172 = vadd.f32 %v170, %v171
  %v173 = vrot.slane %v172, 2
  %v174 = vadd.f32 %v172, %v173
  %v175 = vrot.slane %v174, 1
  %v176 = vadd.f32 %v174, %v175
  %v177 = vmul.f32 %v121, 2.0
  %v178 = vmul.f32 %v124, 2.0
  %v179 = vmul.f32 %v127, 2.0
  %v180 = vmul.f32 %v130, 2.0
  %v181 = vmul.f32 %v133, 2.0
  %v182 = vmul.f32 %v136, 2.0
  %v183 = vmul.f32 %v139, 2.0
  %v184 = vmul.f32 %v142, 2.0
  %v185 = vmul.f32 %v145, 2.0
  %v186 = vmul.f32 %v148, 2.0
  %v187 = vmul.f32 %v151, 2.0
  %v188 = vmul.f32 %v154, 2.0
  %v189 = vmul.f32 %v157, 2.0
  %v190 = vmul.f32 %v160, 2.0
  %v191 = vmul.f32 %v163, 2.0
  %v192 = vmul.f32 %v166, 2.0
  %v193 = vsub.f32 %v177, %v176
  %v194 = vsub.f32 %v178, %v176
  %v195 = vsub.f32 %v179, %v176
  %v196 = vsub.f32 %v180, %v176
  %v197 = vsub.f32 %v181, %v176
  %v198 = vsub.f32 %v182, %v176
  %v199 = vsub.f32 %v183, %v176
  %v200 = vsub.f32 %v184, %v176
  %v201 = vsub.f32 %v185, %v176
  %v202 = vsub.f32 %v186, %v176
  %v203 = vsub.f32 %v187, %v176
  %v204 = vsub.f32 %v188, %v176
  %v205 = vsub.f32 %v189, %v176
  %v206 = vsub.f32 %v190, %v176
  %v207 = vsub.f32 %v191, %v176
  %v208 = vsub.f32 %v192, %v176
  %v209 = vlaneseq
  %v210 = vand.u32 %v209, 127
  %211 = vmax.xlane.f32.xlu0 %v193
  %v212 = vpop.xlane.xlu0 %211
  %213 = vmax.xlane.f32.xlu0 %v194
  %v214 = vpop.xlane.xlu0 %213
  %215 = vmax.xlane.f32.xlu0 %v195
  %v216 = vpop.xlane.xlu0 %215
  %217 = vmax.xlane.f32.xlu0 %v196
  %v218 = vpop.xlane.xlu0 %217
  %219 = vmax.xlane.f32.xlu0 %v197
  %v220 = vpop.xlane.xlu0 %219
  %221 = vmax.xlane.f32.xlu0 %v198
  %v222 = vpop.xlane.xlu0 %221
  %223 = vmax.xlane.f32.xlu0 %v199
  %v224 = vpop.xlane.xlu0 %223
  %225 = vmax.xlane.f32.xlu0 %v200
  %v226 = vpop.xlane.xlu0 %225
  %227 = vmax.xlane.f32.xlu0 %v201
  %v228 = vpop.xlane.xlu0 %227
  %229 = vmax.xlane.f32.xlu0 %v202
  %v230 = vpop.xlane.xlu0 %229
  %231 = vmax.xlane.f32.xlu0 %v203
  %v232 = vpop.xlane.xlu0 %231
  %233 = vmax.xlane.f32.xlu0 %v204
  %v234 = vpop.xlane.xlu0 %233
  %235 = vmax.xlane.f32.xlu0 %v205
  %v236 = vpop.xlane.xlu0 %235
  %237 = vmax.xlane.f32.xlu0 %v206
  %v238 = vpop.xlane.xlu0 %237
  %239 = vmax.xlane.f32.xlu0 %v207
  %v240 = vpop.xlane.xlu0 %239
  %241 = vmax.xlane.f32.xlu0 %v208
  %v242 = vpop.xlane.xlu0 %241
  %vm243 = vcmp.eq.f32.partialorder %v193, %v212
  %vm244 = vcmp.eq.f32.partialorder %v194, %v214
  %vm245 = vcmp.eq.f32.partialorder %v195, %v216
  %vm246 = vcmp.eq.f32.partialorder %v196, %v218
  %vm247 = vcmp.eq.f32.partialorder %v197, %v220
  %vm248 = vcmp.eq.f32.partialorder %v198, %v222
  %vm249 = vcmp.eq.f32.partialorder %v199, %v224
  %vm250 = vcmp.eq.f32.partialorder %v200, %v226
  %vm251 = vcmp.eq.f32.partialorder %v201, %v228
  %vm252 = vcmp.eq.f32.partialorder %v202, %v230
  %vm253 = vcmp.eq.f32.partialorder %v203, %v232
  %vm254 = vcmp.eq.f32.partialorder %v204, %v234
  %vm255 = vcmp.eq.f32.partialorder %v205, %v236
  %vm256 = vcmp.eq.f32.partialorder %v206, %v238
  %vm257 = vcmp.eq.f32.partialorder %v207, %v240
  %vm258 = vcmp.eq.f32.partialorder %v208, %v242
  %v259 = vsel %vm243, %v210, 128
  %v260 = vsel %vm244, %v210, 128
  %v261 = vsel %vm245, %v210, 128
  %v262 = vsel %vm246, %v210, 128
  %v263 = vsel %vm247, %v210, 128
  %v264 = vsel %vm248, %v210, 128
  %v265 = vsel %vm249, %v210, 128
  %v266 = vsel %vm250, %v210, 128
  %v267 = vsel %vm251, %v210, 128
  %v268 = vsel %vm252, %v210, 128
  %v269 = vsel %vm253, %v210, 128
  %v270 = vsel %vm254, %v210, 128
  %v271 = vsel %vm255, %v210, 128
  %v272 = vsel %vm256, %v210, 128
  %v273 = vsel %vm257, %v210, 128
  %v274 = vsel %vm258, %v210, 128
  %v275 = vand.u32 %v259, 65535
  %v276 = vshra.s32 %v259, 16
  %v277 = vcvt.s32.f32 %v275
  %v278 = vcvt.s32.f32 %v276
  %279 = vmin.xlane.f32.xlu0 %v278
  %v280 = vpop.xlane.xlu0 %279
  %vm281 = vcmp.eq.f32.partialorder %v278, %v280
  %v282 = vsel %vm281, %v277, inf
  %283 = vmin.xlane.f32.xlu0 %v282
  %v284 = vpop.xlane.xlu0 %283
  %v285 = vcvt.f32.s32 %v284
  %v286 = vcvt.f32.s32 %v280
  %v287 = vshll.u32 %v286, 16
  %v288 = vadd.s32 %v287, %v285
  %v289 = vand.u32 %v260, 65535
  %v290 = vshra.s32 %v260, 16
  %v291 = vcvt.s32.f32 %v289
  %v292 = vcvt.s32.f32 %v290
  %293 = vmin.xlane.f32.xlu0 %v292
  %v294 = vpop.xlane.xlu0 %293
  %vm295 = vcmp.eq.f32.partialorder %v292, %v294
  %v296 = vsel %vm295, %v291, inf
  %297 = vmin.xlane.f32.xlu0 %v296
  %v298 = vpop.xlane.xlu0 %297
  %v299 = vcvt.f32.s32 %v298
  %v300 = vcvt.f32.s32 %v294
  %v301 = vshll.u32 %v300, 16
  %v302 = vadd.s32 %v301, %v299
  %v303 = vand.u32 %v261, 65535
  %v304 = vshra.s32 %v261, 16
  %v305 = vcvt.s32.f32 %v303
  %v306 = vcvt.s32.f32 %v304
  %307 = vmin.xlane.f32.xlu0 %v306
  %v308 = vpop.xlane.xlu0 %307
  %vm309 = vcmp.eq.f32.partialorder %v306, %v308
  %v310 = vsel %vm309, %v305, inf
  %311 = vmin.xlane.f32.xlu0 %v310
  %v312 = vpop.xlane.xlu0 %311
  %v313 = vcvt.f32.s32 %v312
  %v314 = vcvt.f32.s32 %v308
  %v315 = vshll.u32 %v314, 16
  %v316 = vadd.s32 %v315, %v313
  %v317 = vand.u32 %v262, 65535
  %v318 = vshra.s32 %v262, 16
  %v319 = vcvt.s32.f32 %v317
  %v320 = vcvt.s32.f32 %v318
  %321 = vmin.xlane.f32.xlu0 %v320
  %v322 = vpop.xlane.xlu0 %321
  %vm323 = vcmp.eq.f32.partialorder %v320, %v322
  %v324 = vsel %vm323, %v319, inf
  %325 = vmin.xlane.f32.xlu0 %v324
  %v326 = vpop.xlane.xlu0 %325
  %v327 = vcvt.f32.s32 %v326
  %v328 = vcvt.f32.s32 %v322
  %v329 = vshll.u32 %v328, 16
  %v330 = vadd.s32 %v329, %v327
  %v331 = vand.u32 %v263, 65535
  %v332 = vshra.s32 %v263, 16
  %v333 = vcvt.s32.f32 %v331
  %v334 = vcvt.s32.f32 %v332
  %335 = vmin.xlane.f32.xlu0 %v334
  %v336 = vpop.xlane.xlu0 %335
  %vm337 = vcmp.eq.f32.partialorder %v334, %v336
  %v338 = vsel %vm337, %v333, inf
  %339 = vmin.xlane.f32.xlu0 %v338
  %v340 = vpop.xlane.xlu0 %339
  %v341 = vcvt.f32.s32 %v340
  %v342 = vcvt.f32.s32 %v336
  %v343 = vshll.u32 %v342, 16
  %v344 = vadd.s32 %v343, %v341
  %v345 = vand.u32 %v264, 65535
  %v346 = vshra.s32 %v264, 16
  %v347 = vcvt.s32.f32 %v345
  %v348 = vcvt.s32.f32 %v346
  %349 = vmin.xlane.f32.xlu0 %v348
  %v350 = vpop.xlane.xlu0 %349
  %vm351 = vcmp.eq.f32.partialorder %v348, %v350
  %v352 = vsel %vm351, %v347, inf
  %353 = vmin.xlane.f32.xlu0 %v352
  %v354 = vpop.xlane.xlu0 %353
  %v355 = vcvt.f32.s32 %v354
  %v356 = vcvt.f32.s32 %v350
  %v357 = vshll.u32 %v356, 16
  %v358 = vadd.s32 %v357, %v355
  %v359 = vand.u32 %v265, 65535
  %v360 = vshra.s32 %v265, 16
  %v361 = vcvt.s32.f32 %v359
  %v362 = vcvt.s32.f32 %v360
  %363 = vmin.xlane.f32.xlu0 %v362
  %v364 = vpop.xlane.xlu0 %363
  %vm365 = vcmp.eq.f32.partialorder %v362, %v364
  %v366 = vsel %vm365, %v361, inf
  %367 = vmin.xlane.f32.xlu0 %v366
  %v368 = vpop.xlane.xlu0 %367
  %v369 = vcvt.f32.s32 %v368
  %v370 = vcvt.f32.s32 %v364
  %v371 = vshll.u32 %v370, 16
  %v372 = vadd.s32 %v371, %v369
  %v373 = vand.u32 %v266, 65535
  %v374 = vshra.s32 %v266, 16
  %v375 = vcvt.s32.f32 %v373
  %v376 = vcvt.s32.f32 %v374
  %377 = vmin.xlane.f32.xlu0 %v376
  %v378 = vpop.xlane.xlu0 %377
  %vm379 = vcmp.eq.f32.partialorder %v376, %v378
  %v380 = vsel %vm379, %v375, inf
  %381 = vmin.xlane.f32.xlu0 %v380
  %v382 = vpop.xlane.xlu0 %381
  %v383 = vcvt.f32.s32 %v382
  %v384 = vcvt.f32.s32 %v378
  %v385 = vshll.u32 %v384, 16
  %v386 = vadd.s32 %v385, %v383
  %v387 = vand.u32 %v267, 65535
  %v388 = vshra.s32 %v267, 16
  %v389 = vcvt.s32.f32 %v387
  %v390 = vcvt.s32.f32 %v388
  %391 = vmin.xlane.f32.xlu0 %v390
  %v392 = vpop.xlane.xlu0 %391
  %vm393 = vcmp.eq.f32.partialorder %v390, %v392
  %v394 = vsel %vm393, %v389, inf
  %395 = vmin.xlane.f32.xlu0 %v394
  %v396 = vpop.xlane.xlu0 %395
  %v397 = vcvt.f32.s32 %v396
  %v398 = vcvt.f32.s32 %v392
  %v399 = vshll.u32 %v398, 16
  %v400 = vadd.s32 %v399, %v397
  %v401 = vand.u32 %v268, 65535
  %v402 = vshra.s32 %v268, 16
  %v403 = vcvt.s32.f32 %v401
  %v404 = vcvt.s32.f32 %v402
  %405 = vmin.xlane.f32.xlu0 %v404
  %v406 = vpop.xlane.xlu0 %405
  %vm407 = vcmp.eq.f32.partialorder %v404, %v406
  %v408 = vsel %vm407, %v403, inf
  %409 = vmin.xlane.f32.xlu0 %v408
  %v410 = vpop.xlane.xlu0 %409
  %v411 = vcvt.f32.s32 %v410
  %v412 = vcvt.f32.s32 %v406
  %v413 = vshll.u32 %v412, 16
  %v414 = vadd.s32 %v413, %v411
  %v415 = vand.u32 %v269, 65535
  %v416 = vshra.s32 %v269, 16
  %v417 = vcvt.s32.f32 %v415
  %v418 = vcvt.s32.f32 %v416
  %419 = vmin.xlane.f32.xlu0 %v418
  %v420 = vpop.xlane.xlu0 %419
  %vm421 = vcmp.eq.f32.partialorder %v418, %v420
  %v422 = vsel %vm421, %v417, inf
  %423 = vmin.xlane.f32.xlu0 %v422
  %v424 = vpop.xlane.xlu0 %423
  %v425 = vcvt.f32.s32 %v424
  %v426 = vcvt.f32.s32 %v420
  %v427 = vshll.u32 %v426, 16
  %v428 = vadd.s32 %v427, %v425
  %v429 = vand.u32 %v270, 65535
  %v430 = vshra.s32 %v270, 16
  %v431 = vcvt.s32.f32 %v429
  %v432 = vcvt.s32.f32 %v430
  %433 = vmin.xlane.f32.xlu0 %v432
  %v434 = vpop.xlane.xlu0 %433
  %vm435 = vcmp.eq.f32.partialorder %v432, %v434
  %v436 = vsel %vm435, %v431, inf
  %437 = vmin.xlane.f32.xlu0 %v436
  %v438 = vpop.xlane.xlu0 %437
  %v439 = vcvt.f32.s32 %v438
  %v440 = vcvt.f32.s32 %v434
  %v441 = vshll.u32 %v440, 16
  %v442 = vadd.s32 %v441, %v439
  %v443 = vand.u32 %v271, 65535
  %v444 = vshra.s32 %v271, 16
  %v445 = vcvt.s32.f32 %v443
  %v446 = vcvt.s32.f32 %v444
  %447 = vmin.xlane.f32.xlu0 %v446
  %v448 = vpop.xlane.xlu0 %447
  %vm449 = vcmp.eq.f32.partialorder %v446, %v448
  %v450 = vsel %vm449, %v445, inf
  %451 = vmin.xlane.f32.xlu0 %v450
  %v452 = vpop.xlane.xlu0 %451
  %v453 = vcvt.f32.s32 %v452
  %v454 = vcvt.f32.s32 %v448
  %v455 = vshll.u32 %v454, 16
  %v456 = vadd.s32 %v455, %v453
  %v457 = vand.u32 %v272, 65535
  %v458 = vshra.s32 %v272, 16
  %v459 = vcvt.s32.f32 %v457
  %v460 = vcvt.s32.f32 %v458
  %461 = vmin.xlane.f32.xlu0 %v460
  %v462 = vpop.xlane.xlu0 %461
  %vm463 = vcmp.eq.f32.partialorder %v460, %v462
  %v464 = vsel %vm463, %v459, inf
  %465 = vmin.xlane.f32.xlu0 %v464
  %v466 = vpop.xlane.xlu0 %465
  %v467 = vcvt.f32.s32 %v466
  %v468 = vcvt.f32.s32 %v462
  %v469 = vshll.u32 %v468, 16
  %v470 = vadd.s32 %v469, %v467
  %v471 = vand.u32 %v273, 65535
  %v472 = vshra.s32 %v273, 16
  %v473 = vcvt.s32.f32 %v471
  %v474 = vcvt.s32.f32 %v472
  %475 = vmin.xlane.f32.xlu0 %v474
  %v476 = vpop.xlane.xlu0 %475
  %vm477 = vcmp.eq.f32.partialorder %v474, %v476
  %v478 = vsel %vm477, %v473, inf
  %479 = vmin.xlane.f32.xlu0 %v478
  %v480 = vpop.xlane.xlu0 %479
  %v481 = vcvt.f32.s32 %v480
  %v482 = vcvt.f32.s32 %v476
  %v483 = vshll.u32 %v482, 16
  %v484 = vadd.s32 %v483, %v481
  %v485 = vand.u32 %v274, 65535
  %v486 = vshra.s32 %v274, 16
  %v487 = vcvt.s32.f32 %v485
  %v488 = vcvt.s32.f32 %v486
  %489 = vmin.xlane.f32.xlu0 %v488
  %v490 = vpop.xlane.xlu0 %489
  %vm491 = vcmp.eq.f32.partialorder %v488, %v490
  %v492 = vsel %vm491, %v487, inf
  %493 = vmin.xlane.f32.xlu0 %v492
  %v494 = vpop.xlane.xlu0 %493
  %v495 = vcvt.f32.s32 %v494
  %v496 = vcvt.f32.s32 %v490
  %v497 = vshll.u32 %v496, 16
  %v498 = vadd.s32 %v497, %v495
  %vm499 = vcmp.eq.s32.totalorder %v210, %v288
  %vm500 = vcmp.eq.s32.totalorder %v210, %v302
  %vm501 = vcmp.eq.s32.totalorder %v210, %v316
  %vm502 = vcmp.eq.s32.totalorder %v210, %v330
  %vm503 = vcmp.eq.s32.totalorder %v210, %v344
  %vm504 = vcmp.eq.s32.totalorder %v210, %v358
  %vm505 = vcmp.eq.s32.totalorder %v210, %v372
  %vm506 = vcmp.eq.s32.totalorder %v210, %v386
  %vm507 = vcmp.eq.s32.totalorder %v210, %v400
  %vm508 = vcmp.eq.s32.totalorder %v210, %v414
  %vm509 = vcmp.eq.s32.totalorder %v210, %v428
  %vm510 = vcmp.eq.s32.totalorder %v210, %v442
  %vm511 = vcmp.eq.s32.totalorder %v210, %v456
  %vm512 = vcmp.eq.s32.totalorder %v210, %v470
  %vm513 = vcmp.eq.s32.totalorder %v210, %v484
  %vm514 = vcmp.eq.s32.totalorder %v210, %v498
  %v515 = vsel %vm499, -inf, %v193
  %v516 = vsel %vm500, -inf, %v194
  %v517 = vsel %vm501, -inf, %v195
  %v518 = vsel %vm502, -inf, %v196
  %v519 = vsel %vm503, -inf, %v197
  %v520 = vsel %vm504, -inf, %v198
  %v521 = vsel %vm505, -inf, %v199
  %v522 = vsel %vm506, -inf, %v200
  %v523 = vsel %vm507, -inf, %v201
  %v524 = vsel %vm508, -inf, %v202
  %v525 = vsel %vm509, -inf, %v203
  %v526 = vsel %vm510, -inf, %v204
  %v527 = vsel %vm511, -inf, %v205
  %v528 = vsel %vm512, -inf, %v206
  %v529 = vsel %vm513, -inf, %v207
  %v530 = vsel %vm514, -inf, %v208
  %531 = vmax.xlane.f32.xlu0 %v515
  %v532 = vpop.xlane.xlu0 %531
  %533 = vmax.xlane.f32.xlu0 %v516
  %v534 = vpop.xlane.xlu0 %533
  %535 = vmax.xlane.f32.xlu0 %v517
  %v536 = vpop.xlane.xlu0 %535
  %537 = vmax.xlane.f32.xlu0 %v518
  %v538 = vpop.xlane.xlu0 %537
  %539 = vmax.xlane.f32.xlu0 %v519
  %v540 = vpop.xlane.xlu0 %539
  %541 = vmax.xlane.f32.xlu0 %v520
  %v542 = vpop.xlane.xlu0 %541
  %543 = vmax.xlane.f32.xlu0 %v521
  %v544 = vpop.xlane.xlu0 %543
  %545 = vmax.xlane.f32.xlu0 %v522
  %v546 = vpop.xlane.xlu0 %545
  %547 = vmax.xlane.f32.xlu0 %v523
  %v548 = vpop.xlane.xlu0 %547
  %549 = vmax.xlane.f32.xlu0 %v524
  %v550 = vpop.xlane.xlu0 %549
  %551 = vmax.xlane.f32.xlu0 %v525
  %v552 = vpop.xlane.xlu0 %551
  %553 = vmax.xlane.f32.xlu0 %v526
  %v554 = vpop.xlane.xlu0 %553
  %555 = vmax.xlane.f32.xlu0 %v527
  %v556 = vpop.xlane.xlu0 %555
  %557 = vmax.xlane.f32.xlu0 %v528
  %v558 = vpop.xlane.xlu0 %557
  %559 = vmax.xlane.f32.xlu0 %v529
  %v560 = vpop.xlane.xlu0 %559
  %561 = vmax.xlane.f32.xlu0 %v530
  %v562 = vpop.xlane.xlu0 %561
  %vm563 = vcmp.eq.f32.partialorder %v515, %v532
  %vm564 = vcmp.eq.f32.partialorder %v516, %v534
  %vm565 = vcmp.eq.f32.partialorder %v517, %v536
  %vm566 = vcmp.eq.f32.partialorder %v518, %v538
  %vm567 = vcmp.eq.f32.partialorder %v519, %v540
  %vm568 = vcmp.eq.f32.partialorder %v520, %v542
  %vm569 = vcmp.eq.f32.partialorder %v521, %v544
  %vm570 = vcmp.eq.f32.partialorder %v522, %v546
  %vm571 = vcmp.eq.f32.partialorder %v523, %v548
  %vm572 = vcmp.eq.f32.partialorder %v524, %v550
  %vm573 = vcmp.eq.f32.partialorder %v525, %v552
  %vm574 = vcmp.eq.f32.partialorder %v526, %v554
  %vm575 = vcmp.eq.f32.partialorder %v527, %v556
  %vm576 = vcmp.eq.f32.partialorder %v528, %v558
  %vm577 = vcmp.eq.f32.partialorder %v529, %v560
  %vm578 = vcmp.eq.f32.partialorder %v530, %v562
  %v579 = vsel %vm563, %v210, 128
  %v580 = vsel %vm564, %v210, 128
  %v581 = vsel %vm565, %v210, 128
  %v582 = vsel %vm566, %v210, 128
  %v583 = vsel %vm567, %v210, 128
  %v584 = vsel %vm568, %v210, 128
  %v585 = vsel %vm569, %v210, 128
  %v586 = vsel %vm570, %v210, 128
  %v587 = vsel %vm571, %v210, 128
  %v588 = vsel %vm572, %v210, 128
  %v589 = vsel %vm573, %v210, 128
  %v590 = vsel %vm574, %v210, 128
  %v591 = vsel %vm575, %v210, 128
  %v592 = vsel %vm576, %v210, 128
  %v593 = vsel %vm577, %v210, 128
  %v594 = vsel %vm578, %v210, 128
  %v595 = vand.u32 %v579, 65535
  %v596 = vshra.s32 %v579, 16
  %v597 = vcvt.s32.f32 %v595
  %v598 = vcvt.s32.f32 %v596
  %599 = vmin.xlane.f32.xlu0 %v598
  %v600 = vpop.xlane.xlu0 %599
  %vm601 = vcmp.eq.f32.partialorder %v598, %v600
  %v602 = vsel %vm601, %v597, inf
  %603 = vmin.xlane.f32.xlu0 %v602
  %v604 = vpop.xlane.xlu0 %603
  %v605 = vcvt.f32.s32 %v604
  %v606 = vcvt.f32.s32 %v600
  %v607 = vshll.u32 %v606, 16
  %v608 = vadd.s32 %v607, %v605
  %v609 = vand.u32 %v580, 65535
  %v610 = vshra.s32 %v580, 16
  %v611 = vcvt.s32.f32 %v609
  %v612 = vcvt.s32.f32 %v610
  %613 = vmin.xlane.f32.xlu0 %v612
  %v614 = vpop.xlane.xlu0 %613
  %vm615 = vcmp.eq.f32.partialorder %v612, %v614
  %v616 = vsel %vm615, %v611, inf
  %617 = vmin.xlane.f32.xlu0 %v616
  %v618 = vpop.xlane.xlu0 %617
  %v619 = vcvt.f32.s32 %v618
  %v620 = vcvt.f32.s32 %v614
  %v621 = vshll.u32 %v620, 16
  %v622 = vadd.s32 %v621, %v619
  %v623 = vand.u32 %v581, 65535
  %v624 = vshra.s32 %v581, 16
  %v625 = vcvt.s32.f32 %v623
  %v626 = vcvt.s32.f32 %v624
  %627 = vmin.xlane.f32.xlu0 %v626
  %v628 = vpop.xlane.xlu0 %627
  %vm629 = vcmp.eq.f32.partialorder %v626, %v628
  %v630 = vsel %vm629, %v625, inf
  %631 = vmin.xlane.f32.xlu0 %v630
  %v632 = vpop.xlane.xlu0 %631
  %v633 = vcvt.f32.s32 %v632
  %v634 = vcvt.f32.s32 %v628
  %v635 = vshll.u32 %v634, 16
  %v636 = vadd.s32 %v635, %v633
  %v637 = vand.u32 %v582, 65535
  %v638 = vshra.s32 %v582, 16
  %v639 = vcvt.s32.f32 %v637
  %v640 = vcvt.s32.f32 %v638
  %641 = vmin.xlane.f32.xlu0 %v640
  %v642 = vpop.xlane.xlu0 %641
  %vm643 = vcmp.eq.f32.partialorder %v640, %v642
  %v644 = vsel %vm643, %v639, inf
  %645 = vmin.xlane.f32.xlu0 %v644
  %v646 = vpop.xlane.xlu0 %645
  %v647 = vcvt.f32.s32 %v646
  %v648 = vcvt.f32.s32 %v642
  %v649 = vshll.u32 %v648, 16
  %v650 = vadd.s32 %v649, %v647
  %v651 = vand.u32 %v583, 65535
  %v652 = vshra.s32 %v583, 16
  %v653 = vcvt.s32.f32 %v651
  %v654 = vcvt.s32.f32 %v652
  %655 = vmin.xlane.f32.xlu0 %v654
  %v656 = vpop.xlane.xlu0 %655
  %vm657 = vcmp.eq.f32.partialorder %v654, %v656
  %v658 = vsel %vm657, %v653, inf
  %659 = vmin.xlane.f32.xlu0 %v658
  %v660 = vpop.xlane.xlu0 %659
  %v661 = vcvt.f32.s32 %v660
  %v662 = vcvt.f32.s32 %v656
  %v663 = vshll.u32 %v662, 16
  %v664 = vadd.s32 %v663, %v661
  %v665 = vand.u32 %v584, 65535
  %v666 = vshra.s32 %v584, 16
  %v667 = vcvt.s32.f32 %v665
  %v668 = vcvt.s32.f32 %v666
  %669 = vmin.xlane.f32.xlu0 %v668
  %v670 = vpop.xlane.xlu0 %669
  %vm671 = vcmp.eq.f32.partialorder %v668, %v670
  %v672 = vsel %vm671, %v667, inf
  %673 = vmin.xlane.f32.xlu0 %v672
  %v674 = vpop.xlane.xlu0 %673
  %v675 = vcvt.f32.s32 %v674
  %v676 = vcvt.f32.s32 %v670
  %v677 = vshll.u32 %v676, 16
  %v678 = vadd.s32 %v677, %v675
  %v679 = vand.u32 %v585, 65535
  %v680 = vshra.s32 %v585, 16
  %v681 = vcvt.s32.f32 %v679
  %v682 = vcvt.s32.f32 %v680
  %683 = vmin.xlane.f32.xlu0 %v682
  %v684 = vpop.xlane.xlu0 %683
  %vm685 = vcmp.eq.f32.partialorder %v682, %v684
  %v686 = vsel %vm685, %v681, inf
  %687 = vmin.xlane.f32.xlu0 %v686
  %v688 = vpop.xlane.xlu0 %687
  %v689 = vcvt.f32.s32 %v688
  %v690 = vcvt.f32.s32 %v684
  %v691 = vshll.u32 %v690, 16
  %v692 = vadd.s32 %v691, %v689
  %v693 = vand.u32 %v586, 65535
  %v694 = vshra.s32 %v586, 16
  %v695 = vcvt.s32.f32 %v693
  %v696 = vcvt.s32.f32 %v694
  %697 = vmin.xlane.f32.xlu0 %v696
  %v698 = vpop.xlane.xlu0 %697
  %vm699 = vcmp.eq.f32.partialorder %v696, %v698
  %v700 = vsel %vm699, %v695, inf
  %701 = vmin.xlane.f32.xlu0 %v700
  %v702 = vpop.xlane.xlu0 %701
  %v703 = vcvt.f32.s32 %v702
  %v704 = vcvt.f32.s32 %v698
  %v705 = vshll.u32 %v704, 16
  %v706 = vadd.s32 %v705, %v703
  %v707 = vand.u32 %v587, 65535
  %v708 = vshra.s32 %v587, 16
  %v709 = vcvt.s32.f32 %v707
  %v710 = vcvt.s32.f32 %v708
  %711 = vmin.xlane.f32.xlu0 %v710
  %v712 = vpop.xlane.xlu0 %711
  %vm713 = vcmp.eq.f32.partialorder %v710, %v712
  %v714 = vsel %vm713, %v709, inf
  %715 = vmin.xlane.f32.xlu0 %v714
  %v716 = vpop.xlane.xlu0 %715
  %v717 = vcvt.f32.s32 %v716
  %v718 = vcvt.f32.s32 %v712
  %v719 = vshll.u32 %v718, 16
  %v720 = vadd.s32 %v719, %v717
  %v721 = vand.u32 %v588, 65535
  %v722 = vshra.s32 %v588, 16
  %v723 = vcvt.s32.f32 %v721
  %v724 = vcvt.s32.f32 %v722
  %725 = vmin.xlane.f32.xlu0 %v724
  %v726 = vpop.xlane.xlu0 %725
  %vm727 = vcmp.eq.f32.partialorder %v724, %v726
  %v728 = vsel %vm727, %v723, inf
  %729 = vmin.xlane.f32.xlu0 %v728
  %v730 = vpop.xlane.xlu0 %729
  %v731 = vcvt.f32.s32 %v730
  %v732 = vcvt.f32.s32 %v726
  %v733 = vshll.u32 %v732, 16
  %v734 = vadd.s32 %v733, %v731
  %v735 = vand.u32 %v589, 65535
  %v736 = vshra.s32 %v589, 16
  %v737 = vcvt.s32.f32 %v735
  %v738 = vcvt.s32.f32 %v736
  %739 = vmin.xlane.f32.xlu0 %v738
  %v740 = vpop.xlane.xlu0 %739
  %vm741 = vcmp.eq.f32.partialorder %v738, %v740
  %v742 = vsel %vm741, %v737, inf
  %743 = vmin.xlane.f32.xlu0 %v742
  %v744 = vpop.xlane.xlu0 %743
  %v745 = vcvt.f32.s32 %v744
  %v746 = vcvt.f32.s32 %v740
  %v747 = vshll.u32 %v746, 16
  %v748 = vadd.s32 %v747, %v745
  %v749 = vand.u32 %v590, 65535
  %v750 = vshra.s32 %v590, 16
  %v751 = vcvt.s32.f32 %v749
  %v752 = vcvt.s32.f32 %v750
  %753 = vmin.xlane.f32.xlu0 %v752
  %v754 = vpop.xlane.xlu0 %753
  %vm755 = vcmp.eq.f32.partialorder %v752, %v754
  %v756 = vsel %vm755, %v751, inf
  %757 = vmin.xlane.f32.xlu0 %v756
  %v758 = vpop.xlane.xlu0 %757
  %v759 = vcvt.f32.s32 %v758
  %v760 = vcvt.f32.s32 %v754
  %v761 = vshll.u32 %v760, 16
  %v762 = vadd.s32 %v761, %v759
  %v763 = vand.u32 %v591, 65535
  %v764 = vshra.s32 %v591, 16
  %v765 = vcvt.s32.f32 %v763
  %v766 = vcvt.s32.f32 %v764
  %767 = vmin.xlane.f32.xlu0 %v766
  %v768 = vpop.xlane.xlu0 %767
  %vm769 = vcmp.eq.f32.partialorder %v766, %v768
  %v770 = vsel %vm769, %v765, inf
  %771 = vmin.xlane.f32.xlu0 %v770
  %v772 = vpop.xlane.xlu0 %771
  %v773 = vcvt.f32.s32 %v772
  %v774 = vcvt.f32.s32 %v768
  %v775 = vshll.u32 %v774, 16
  %v776 = vadd.s32 %v775, %v773
  %v777 = vand.u32 %v592, 65535
  %v778 = vshra.s32 %v592, 16
  %v779 = vcvt.s32.f32 %v777
  %v780 = vcvt.s32.f32 %v778
  %781 = vmin.xlane.f32.xlu0 %v780
  %v782 = vpop.xlane.xlu0 %781
  %vm783 = vcmp.eq.f32.partialorder %v780, %v782
  %v784 = vsel %vm783, %v779, inf
  %785 = vmin.xlane.f32.xlu0 %v784
  %v786 = vpop.xlane.xlu0 %785
  %v787 = vcvt.f32.s32 %v786
  %v788 = vcvt.f32.s32 %v782
  %v789 = vshll.u32 %v788, 16
  %v790 = vadd.s32 %v789, %v787
  %v791 = vand.u32 %v593, 65535
  %v792 = vshra.s32 %v593, 16
  %v793 = vcvt.s32.f32 %v791
  %v794 = vcvt.s32.f32 %v792
  %795 = vmin.xlane.f32.xlu0 %v794
  %v796 = vpop.xlane.xlu0 %795
  %vm797 = vcmp.eq.f32.partialorder %v794, %v796
  %v798 = vsel %vm797, %v793, inf
  %799 = vmin.xlane.f32.xlu0 %v798
  %v800 = vpop.xlane.xlu0 %799
  %v801 = vcvt.f32.s32 %v800
  %v802 = vcvt.f32.s32 %v796
  %v803 = vshll.u32 %v802, 16
  %v804 = vadd.s32 %v803, %v801
  %v805 = vand.u32 %v594, 65535
  %v806 = vshra.s32 %v594, 16
  %v807 = vcvt.s32.f32 %v805
  %v808 = vcvt.s32.f32 %v806
  %809 = vmin.xlane.f32.xlu0 %v808
  %v810 = vpop.xlane.xlu0 %809
  %vm811 = vcmp.eq.f32.partialorder %v808, %v810
  %v812 = vsel %vm811, %v807, inf
  %813 = vmin.xlane.f32.xlu0 %v812
  %v814 = vpop.xlane.xlu0 %813
  %v815 = vcvt.f32.s32 %v814
  %v816 = vcvt.f32.s32 %v810
  %v817 = vshll.u32 %v816, 16
  %v818 = vadd.s32 %v817, %v815
  %vm819 = vcmp.eq.s32.totalorder %v210, %v608
  %vm820 = vcmp.eq.s32.totalorder %v210, %v622
  %vm821 = vcmp.eq.s32.totalorder %v210, %v636
  %vm822 = vcmp.eq.s32.totalorder %v210, %v650
  %vm823 = vcmp.eq.s32.totalorder %v210, %v664
  %vm824 = vcmp.eq.s32.totalorder %v210, %v678
  %vm825 = vcmp.eq.s32.totalorder %v210, %v692
  %vm826 = vcmp.eq.s32.totalorder %v210, %v706
  %vm827 = vcmp.eq.s32.totalorder %v210, %v720
  %vm828 = vcmp.eq.s32.totalorder %v210, %v734
  %vm829 = vcmp.eq.s32.totalorder %v210, %v748
  %vm830 = vcmp.eq.s32.totalorder %v210, %v762
  %vm831 = vcmp.eq.s32.totalorder %v210, %v776
  %vm832 = vcmp.eq.s32.totalorder %v210, %v790
  %vm833 = vcmp.eq.s32.totalorder %v210, %v804
  %vm834 = vcmp.eq.s32.totalorder %v210, %v818
  %vm835 = vmor %vm499, %vm819
  %vm836 = vmor %vm500, %vm820
  %vm837 = vmor %vm501, %vm821
  %vm838 = vmor %vm502, %vm822
  %vm839 = vmor %vm503, %vm823
  %vm840 = vmor %vm504, %vm824
  %vm841 = vmor %vm505, %vm825
  %vm842 = vmor %vm506, %vm826
  %vm843 = vmor %vm507, %vm827
  %vm844 = vmor %vm508, %vm828
  %vm845 = vmor %vm509, %vm829
  %vm846 = vmor %vm510, %vm830
  %vm847 = vmor %vm511, %vm831
  %vm848 = vmor %vm512, %vm832
  %vm849 = vmor %vm513, %vm833
  %vm850 = vmor %vm514, %vm834
  %v851 = vsel %vm819, -inf, %v515
  %v852 = vsel %vm820, -inf, %v516
  %v853 = vsel %vm821, -inf, %v517
  %v854 = vsel %vm822, -inf, %v518
  %v855 = vsel %vm823, -inf, %v519
  %v856 = vsel %vm824, -inf, %v520
  %v857 = vsel %vm825, -inf, %v521
  %v858 = vsel %vm826, -inf, %v522
  %v859 = vsel %vm827, -inf, %v523
  %v860 = vsel %vm828, -inf, %v524
  %v861 = vsel %vm829, -inf, %v525
  %v862 = vsel %vm830, -inf, %v526
  %v863 = vsel %vm831, -inf, %v527
  %v864 = vsel %vm832, -inf, %v528
  %v865 = vsel %vm833, -inf, %v529
  %v866 = vsel %vm834, -inf, %v530
  %867 = vmax.xlane.f32.xlu0 %v851
  %v868 = vpop.xlane.xlu0 %867
  %869 = vmax.xlane.f32.xlu0 %v852
  %v870 = vpop.xlane.xlu0 %869
  %871 = vmax.xlane.f32.xlu0 %v853
  %v872 = vpop.xlane.xlu0 %871
  %873 = vmax.xlane.f32.xlu0 %v854
  %v874 = vpop.xlane.xlu0 %873
  %875 = vmax.xlane.f32.xlu0 %v855
  %v876 = vpop.xlane.xlu0 %875
  %877 = vmax.xlane.f32.xlu0 %v856
  %v878 = vpop.xlane.xlu0 %877
  %879 = vmax.xlane.f32.xlu0 %v857
  %v880 = vpop.xlane.xlu0 %879
  %881 = vmax.xlane.f32.xlu0 %v858
  %v882 = vpop.xlane.xlu0 %881
  %883 = vmax.xlane.f32.xlu0 %v859
  %v884 = vpop.xlane.xlu0 %883
  %885 = vmax.xlane.f32.xlu0 %v860
  %v886 = vpop.xlane.xlu0 %885
  %887 = vmax.xlane.f32.xlu0 %v861
  %v888 = vpop.xlane.xlu0 %887
  %889 = vmax.xlane.f32.xlu0 %v862
  %v890 = vpop.xlane.xlu0 %889
  %891 = vmax.xlane.f32.xlu0 %v863
  %v892 = vpop.xlane.xlu0 %891
  %893 = vmax.xlane.f32.xlu0 %v864
  %v894 = vpop.xlane.xlu0 %893
  %895 = vmax.xlane.f32.xlu0 %v865
  %v896 = vpop.xlane.xlu0 %895
  %897 = vmax.xlane.f32.xlu0 %v866
  %v898 = vpop.xlane.xlu0 %897
  %vm899 = vcmp.eq.f32.partialorder %v851, %v868
  %vm900 = vcmp.eq.f32.partialorder %v852, %v870
  %vm901 = vcmp.eq.f32.partialorder %v853, %v872
  %vm902 = vcmp.eq.f32.partialorder %v854, %v874
  %vm903 = vcmp.eq.f32.partialorder %v855, %v876
  %vm904 = vcmp.eq.f32.partialorder %v856, %v878
  %vm905 = vcmp.eq.f32.partialorder %v857, %v880
  %vm906 = vcmp.eq.f32.partialorder %v858, %v882
  %vm907 = vcmp.eq.f32.partialorder %v859, %v884
  %vm908 = vcmp.eq.f32.partialorder %v860, %v886
  %vm909 = vcmp.eq.f32.partialorder %v861, %v888
  %vm910 = vcmp.eq.f32.partialorder %v862, %v890
  %vm911 = vcmp.eq.f32.partialorder %v863, %v892
  %vm912 = vcmp.eq.f32.partialorder %v864, %v894
  %vm913 = vcmp.eq.f32.partialorder %v865, %v896
  %vm914 = vcmp.eq.f32.partialorder %v866, %v898
  %v915 = vsel %vm899, %v210, 128
  %v916 = vsel %vm900, %v210, 128
  %v917 = vsel %vm901, %v210, 128
  %v918 = vsel %vm902, %v210, 128
  %v919 = vsel %vm903, %v210, 128
  %v920 = vsel %vm904, %v210, 128
  %v921 = vsel %vm905, %v210, 128
  %v922 = vsel %vm906, %v210, 128
  %v923 = vsel %vm907, %v210, 128
  %v924 = vsel %vm908, %v210, 128
  %v925 = vsel %vm909, %v210, 128
  %v926 = vsel %vm910, %v210, 128
  %v927 = vsel %vm911, %v210, 128
  %v928 = vsel %vm912, %v210, 128
  %v929 = vsel %vm913, %v210, 128
  %v930 = vsel %vm914, %v210, 128
  %v931 = vand.u32 %v915, 65535
  %v932 = vshra.s32 %v915, 16
  %v933 = vcvt.s32.f32 %v931
  %v934 = vcvt.s32.f32 %v932
  %935 = vmin.xlane.f32.xlu0 %v934
  %v936 = vpop.xlane.xlu0 %935
  %vm937 = vcmp.eq.f32.partialorder %v934, %v936
  %v938 = vsel %vm937, %v933, inf
  %939 = vmin.xlane.f32.xlu0 %v938
  %v940 = vpop.xlane.xlu0 %939
  %v941 = vcvt.f32.s32 %v940
  %v942 = vcvt.f32.s32 %v936
  %v943 = vshll.u32 %v942, 16
  %v944 = vadd.s32 %v943, %v941
  %v945 = vand.u32 %v916, 65535
  %v946 = vshra.s32 %v916, 16
  %v947 = vcvt.s32.f32 %v945
  %v948 = vcvt.s32.f32 %v946
  %949 = vmin.xlane.f32.xlu0 %v948
  %v950 = vpop.xlane.xlu0 %949
  %vm951 = vcmp.eq.f32.partialorder %v948, %v950
  %v952 = vsel %vm951, %v947, inf
  %953 = vmin.xlane.f32.xlu0 %v952
  %v954 = vpop.xlane.xlu0 %953
  %v955 = vcvt.f32.s32 %v954
  %v956 = vcvt.f32.s32 %v950
  %v957 = vshll.u32 %v956, 16
  %v958 = vadd.s32 %v957, %v955
  %v959 = vand.u32 %v917, 65535
  %v960 = vshra.s32 %v917, 16
  %v961 = vcvt.s32.f32 %v959
  %v962 = vcvt.s32.f32 %v960
  %963 = vmin.xlane.f32.xlu0 %v962
  %v964 = vpop.xlane.xlu0 %963
  %vm965 = vcmp.eq.f32.partialorder %v962, %v964
  %v966 = vsel %vm965, %v961, inf
  %967 = vmin.xlane.f32.xlu0 %v966
  %v968 = vpop.xlane.xlu0 %967
  %v969 = vcvt.f32.s32 %v968
  %v970 = vcvt.f32.s32 %v964
  %v971 = vshll.u32 %v970, 16
  %v972 = vadd.s32 %v971, %v969
  %v973 = vand.u32 %v918, 65535
  %v974 = vshra.s32 %v918, 16
  %v975 = vcvt.s32.f32 %v973
  %v976 = vcvt.s32.f32 %v974
  %977 = vmin.xlane.f32.xlu0 %v976
  %v978 = vpop.xlane.xlu0 %977
  %vm979 = vcmp.eq.f32.partialorder %v976, %v978
  %v980 = vsel %vm979, %v975, inf
  %981 = vmin.xlane.f32.xlu0 %v980
  %v982 = vpop.xlane.xlu0 %981
  %v983 = vcvt.f32.s32 %v982
  %v984 = vcvt.f32.s32 %v978
  %v985 = vshll.u32 %v984, 16
  %v986 = vadd.s32 %v985, %v983
  %v987 = vand.u32 %v919, 65535
  %v988 = vshra.s32 %v919, 16
  %v989 = vcvt.s32.f32 %v987
  %v990 = vcvt.s32.f32 %v988
  %991 = vmin.xlane.f32.xlu0 %v990
  %v992 = vpop.xlane.xlu0 %991
  %vm993 = vcmp.eq.f32.partialorder %v990, %v992
  %v994 = vsel %vm993, %v989, inf
  %995 = vmin.xlane.f32.xlu0 %v994
  %v996 = vpop.xlane.xlu0 %995
  %v997 = vcvt.f32.s32 %v996
  %v998 = vcvt.f32.s32 %v992
  %v999 = vshll.u32 %v998, 16
  %v1000 = vadd.s32 %v999, %v997
  %v1001 = vand.u32 %v920, 65535
  %v1002 = vshra.s32 %v920, 16
  %v1003 = vcvt.s32.f32 %v1001
  %v1004 = vcvt.s32.f32 %v1002
  %1005 = vmin.xlane.f32.xlu0 %v1004
  %v1006 = vpop.xlane.xlu0 %1005
  %vm1007 = vcmp.eq.f32.partialorder %v1004, %v1006
  %v1008 = vsel %vm1007, %v1003, inf
  %1009 = vmin.xlane.f32.xlu0 %v1008
  %v1010 = vpop.xlane.xlu0 %1009
  %v1011 = vcvt.f32.s32 %v1010
  %v1012 = vcvt.f32.s32 %v1006
  %v1013 = vshll.u32 %v1012, 16
  %v1014 = vadd.s32 %v1013, %v1011
  %v1015 = vand.u32 %v921, 65535
  %v1016 = vshra.s32 %v921, 16
  %v1017 = vcvt.s32.f32 %v1015
  %v1018 = vcvt.s32.f32 %v1016
  %1019 = vmin.xlane.f32.xlu0 %v1018
  %v1020 = vpop.xlane.xlu0 %1019
  %vm1021 = vcmp.eq.f32.partialorder %v1018, %v1020
  %v1022 = vsel %vm1021, %v1017, inf
  %1023 = vmin.xlane.f32.xlu0 %v1022
  %v1024 = vpop.xlane.xlu0 %1023
  %v1025 = vcvt.f32.s32 %v1024
  %v1026 = vcvt.f32.s32 %v1020
  %v1027 = vshll.u32 %v1026, 16
  %v1028 = vadd.s32 %v1027, %v1025
  %v1029 = vand.u32 %v922, 65535
  %v1030 = vshra.s32 %v922, 16
  %v1031 = vcvt.s32.f32 %v1029
  %v1032 = vcvt.s32.f32 %v1030
  %1033 = vmin.xlane.f32.xlu0 %v1032
  %v1034 = vpop.xlane.xlu0 %1033
  %vm1035 = vcmp.eq.f32.partialorder %v1032, %v1034
  %v1036 = vsel %vm1035, %v1031, inf
  %1037 = vmin.xlane.f32.xlu0 %v1036
  %v1038 = vpop.xlane.xlu0 %1037
  %v1039 = vcvt.f32.s32 %v1038
  %v1040 = vcvt.f32.s32 %v1034
  %v1041 = vshll.u32 %v1040, 16
  %v1042 = vadd.s32 %v1041, %v1039
  %v1043 = vand.u32 %v923, 65535
  %v1044 = vshra.s32 %v923, 16
  %v1045 = vcvt.s32.f32 %v1043
  %v1046 = vcvt.s32.f32 %v1044
  %1047 = vmin.xlane.f32.xlu0 %v1046
  %v1048 = vpop.xlane.xlu0 %1047
  %vm1049 = vcmp.eq.f32.partialorder %v1046, %v1048
  %v1050 = vsel %vm1049, %v1045, inf
  %1051 = vmin.xlane.f32.xlu0 %v1050
  %v1052 = vpop.xlane.xlu0 %1051
  %v1053 = vcvt.f32.s32 %v1052
  %v1054 = vcvt.f32.s32 %v1048
  %v1055 = vshll.u32 %v1054, 16
  %v1056 = vadd.s32 %v1055, %v1053
  %v1057 = vand.u32 %v924, 65535
  %v1058 = vshra.s32 %v924, 16
  %v1059 = vcvt.s32.f32 %v1057
  %v1060 = vcvt.s32.f32 %v1058
  %1061 = vmin.xlane.f32.xlu0 %v1060
  %v1062 = vpop.xlane.xlu0 %1061
  %vm1063 = vcmp.eq.f32.partialorder %v1060, %v1062
  %v1064 = vsel %vm1063, %v1059, inf
  %1065 = vmin.xlane.f32.xlu0 %v1064
  %v1066 = vpop.xlane.xlu0 %1065
  %v1067 = vcvt.f32.s32 %v1066
  %v1068 = vcvt.f32.s32 %v1062
  %v1069 = vshll.u32 %v1068, 16
  %v1070 = vadd.s32 %v1069, %v1067
  %v1071 = vand.u32 %v925, 65535
  %v1072 = vshra.s32 %v925, 16
  %v1073 = vcvt.s32.f32 %v1071
  %v1074 = vcvt.s32.f32 %v1072
  %1075 = vmin.xlane.f32.xlu0 %v1074
  %v1076 = vpop.xlane.xlu0 %1075
  %vm1077 = vcmp.eq.f32.partialorder %v1074, %v1076
  %v1078 = vsel %vm1077, %v1073, inf
  %1079 = vmin.xlane.f32.xlu0 %v1078
  %v1080 = vpop.xlane.xlu0 %1079
  %v1081 = vcvt.f32.s32 %v1080
  %v1082 = vcvt.f32.s32 %v1076
  %v1083 = vshll.u32 %v1082, 16
  %v1084 = vadd.s32 %v1083, %v1081
  %v1085 = vand.u32 %v926, 65535
  %v1086 = vshra.s32 %v926, 16
  %v1087 = vcvt.s32.f32 %v1085
  %v1088 = vcvt.s32.f32 %v1086
  %1089 = vmin.xlane.f32.xlu0 %v1088
  %v1090 = vpop.xlane.xlu0 %1089
  %vm1091 = vcmp.eq.f32.partialorder %v1088, %v1090
  %v1092 = vsel %vm1091, %v1087, inf
  %1093 = vmin.xlane.f32.xlu0 %v1092
  %v1094 = vpop.xlane.xlu0 %1093
  %v1095 = vcvt.f32.s32 %v1094
  %v1096 = vcvt.f32.s32 %v1090
  %v1097 = vshll.u32 %v1096, 16
  %v1098 = vadd.s32 %v1097, %v1095
  %v1099 = vand.u32 %v927, 65535
  %v1100 = vshra.s32 %v927, 16
  %v1101 = vcvt.s32.f32 %v1099
  %v1102 = vcvt.s32.f32 %v1100
  %1103 = vmin.xlane.f32.xlu0 %v1102
  %v1104 = vpop.xlane.xlu0 %1103
  %vm1105 = vcmp.eq.f32.partialorder %v1102, %v1104
  %v1106 = vsel %vm1105, %v1101, inf
  %1107 = vmin.xlane.f32.xlu0 %v1106
  %v1108 = vpop.xlane.xlu0 %1107
  %v1109 = vcvt.f32.s32 %v1108
  %v1110 = vcvt.f32.s32 %v1104
  %v1111 = vshll.u32 %v1110, 16
  %v1112 = vadd.s32 %v1111, %v1109
  %v1113 = vand.u32 %v928, 65535
  %v1114 = vshra.s32 %v928, 16
  %v1115 = vcvt.s32.f32 %v1113
  %v1116 = vcvt.s32.f32 %v1114
  %1117 = vmin.xlane.f32.xlu0 %v1116
  %v1118 = vpop.xlane.xlu0 %1117
  %vm1119 = vcmp.eq.f32.partialorder %v1116, %v1118
  %v1120 = vsel %vm1119, %v1115, inf
  %1121 = vmin.xlane.f32.xlu0 %v1120
  %v1122 = vpop.xlane.xlu0 %1121
  %v1123 = vcvt.f32.s32 %v1122
  %v1124 = vcvt.f32.s32 %v1118
  %v1125 = vshll.u32 %v1124, 16
  %v1126 = vadd.s32 %v1125, %v1123
  %v1127 = vand.u32 %v929, 65535
  %v1128 = vshra.s32 %v929, 16
  %v1129 = vcvt.s32.f32 %v1127
  %v1130 = vcvt.s32.f32 %v1128
  %1131 = vmin.xlane.f32.xlu0 %v1130
  %v1132 = vpop.xlane.xlu0 %1131
  %vm1133 = vcmp.eq.f32.partialorder %v1130, %v1132
  %v1134 = vsel %vm1133, %v1129, inf
  %1135 = vmin.xlane.f32.xlu0 %v1134
  %v1136 = vpop.xlane.xlu0 %1135
  %v1137 = vcvt.f32.s32 %v1136
  %v1138 = vcvt.f32.s32 %v1132
  %v1139 = vshll.u32 %v1138, 16
  %v1140 = vadd.s32 %v1139, %v1137
  %v1141 = vand.u32 %v930, 65535
  %v1142 = vshra.s32 %v930, 16
  %v1143 = vcvt.s32.f32 %v1141
  %v1144 = vcvt.s32.f32 %v1142
  %1145 = vmin.xlane.f32.xlu0 %v1144
  %v1146 = vpop.xlane.xlu0 %1145
  %vm1147 = vcmp.eq.f32.partialorder %v1144, %v1146
  %v1148 = vsel %vm1147, %v1143, inf
  %1149 = vmin.xlane.f32.xlu0 %v1148
  %v1150 = vpop.xlane.xlu0 %1149
  %v1151 = vcvt.f32.s32 %v1150
  %v1152 = vcvt.f32.s32 %v1146
  %v1153 = vshll.u32 %v1152, 16
  %v1154 = vadd.s32 %v1153, %v1151
  %vm1155 = vcmp.eq.s32.totalorder %v210, %v944
  %vm1156 = vcmp.eq.s32.totalorder %v210, %v958
  %vm1157 = vcmp.eq.s32.totalorder %v210, %v972
  %vm1158 = vcmp.eq.s32.totalorder %v210, %v986
  %vm1159 = vcmp.eq.s32.totalorder %v210, %v1000
  %vm1160 = vcmp.eq.s32.totalorder %v210, %v1014
  %vm1161 = vcmp.eq.s32.totalorder %v210, %v1028
  %vm1162 = vcmp.eq.s32.totalorder %v210, %v1042
  %vm1163 = vcmp.eq.s32.totalorder %v210, %v1056
  %vm1164 = vcmp.eq.s32.totalorder %v210, %v1070
  %vm1165 = vcmp.eq.s32.totalorder %v210, %v1084
  %vm1166 = vcmp.eq.s32.totalorder %v210, %v1098
  %vm1167 = vcmp.eq.s32.totalorder %v210, %v1112
  %vm1168 = vcmp.eq.s32.totalorder %v210, %v1126
  %vm1169 = vcmp.eq.s32.totalorder %v210, %v1140
  %vm1170 = vcmp.eq.s32.totalorder %v210, %v1154
  %vm1171 = vmor %vm835, %vm1155
  %vm1172 = vmor %vm836, %vm1156
  %vm1173 = vmor %vm837, %vm1157
  %vm1174 = vmor %vm838, %vm1158
  %vm1175 = vmor %vm839, %vm1159
  %vm1176 = vmor %vm840, %vm1160
  %vm1177 = vmor %vm841, %vm1161
  %vm1178 = vmor %vm842, %vm1162
  %vm1179 = vmor %vm843, %vm1163
  %vm1180 = vmor %vm844, %vm1164
  %vm1181 = vmor %vm845, %vm1165
  %vm1182 = vmor %vm846, %vm1166
  %vm1183 = vmor %vm847, %vm1167
  %vm1184 = vmor %vm848, %vm1168
  %vm1185 = vmor %vm849, %vm1169
  %vm1186 = vmor %vm850, %vm1170
  %v1187 = vsel %vm1155, -inf, %v851
  %v1188 = vsel %vm1156, -inf, %v852
  %v1189 = vsel %vm1157, -inf, %v853
  %v1190 = vsel %vm1158, -inf, %v854
  %v1191 = vsel %vm1159, -inf, %v855
  %v1192 = vsel %vm1160, -inf, %v856
  %v1193 = vsel %vm1161, -inf, %v857
  %v1194 = vsel %vm1162, -inf, %v858
  %v1195 = vsel %vm1163, -inf, %v859
  %v1196 = vsel %vm1164, -inf, %v860
  %v1197 = vsel %vm1165, -inf, %v861
  %v1198 = vsel %vm1166, -inf, %v862
  %v1199 = vsel %vm1167, -inf, %v863
  %v1200 = vsel %vm1168, -inf, %v864
  %v1201 = vsel %vm1169, -inf, %v865
  %v1202 = vsel %vm1170, -inf, %v866
  %1203 = vmax.xlane.f32.xlu0 %v1187
  %v1204 = vpop.xlane.xlu0 %1203
  %1205 = vmax.xlane.f32.xlu0 %v1188
  %v1206 = vpop.xlane.xlu0 %1205
  %1207 = vmax.xlane.f32.xlu0 %v1189
  %v1208 = vpop.xlane.xlu0 %1207
  %1209 = vmax.xlane.f32.xlu0 %v1190
  %v1210 = vpop.xlane.xlu0 %1209
  %1211 = vmax.xlane.f32.xlu0 %v1191
  %v1212 = vpop.xlane.xlu0 %1211
  %1213 = vmax.xlane.f32.xlu0 %v1192
  %v1214 = vpop.xlane.xlu0 %1213
  %1215 = vmax.xlane.f32.xlu0 %v1193
  %v1216 = vpop.xlane.xlu0 %1215
  %1217 = vmax.xlane.f32.xlu0 %v1194
  %v1218 = vpop.xlane.xlu0 %1217
  %1219 = vmax.xlane.f32.xlu0 %v1195
  %v1220 = vpop.xlane.xlu0 %1219
  %1221 = vmax.xlane.f32.xlu0 %v1196
  %v1222 = vpop.xlane.xlu0 %1221
  %1223 = vmax.xlane.f32.xlu0 %v1197
  %v1224 = vpop.xlane.xlu0 %1223
  %1225 = vmax.xlane.f32.xlu0 %v1198
  %v1226 = vpop.xlane.xlu0 %1225
  %1227 = vmax.xlane.f32.xlu0 %v1199
  %v1228 = vpop.xlane.xlu0 %1227
  %1229 = vmax.xlane.f32.xlu0 %v1200
  %v1230 = vpop.xlane.xlu0 %1229
  %1231 = vmax.xlane.f32.xlu0 %v1201
  %v1232 = vpop.xlane.xlu0 %1231
  %1233 = vmax.xlane.f32.xlu0 %v1202
  %v1234 = vpop.xlane.xlu0 %1233
  %vm1235 = vcmp.eq.f32.partialorder %v1187, %v1204
  %vm1236 = vcmp.eq.f32.partialorder %v1188, %v1206
  %vm1237 = vcmp.eq.f32.partialorder %v1189, %v1208
  %vm1238 = vcmp.eq.f32.partialorder %v1190, %v1210
  %vm1239 = vcmp.eq.f32.partialorder %v1191, %v1212
  %vm1240 = vcmp.eq.f32.partialorder %v1192, %v1214
  %vm1241 = vcmp.eq.f32.partialorder %v1193, %v1216
  %vm1242 = vcmp.eq.f32.partialorder %v1194, %v1218
  %vm1243 = vcmp.eq.f32.partialorder %v1195, %v1220
  %vm1244 = vcmp.eq.f32.partialorder %v1196, %v1222
  %vm1245 = vcmp.eq.f32.partialorder %v1197, %v1224
  %vm1246 = vcmp.eq.f32.partialorder %v1198, %v1226
  %vm1247 = vcmp.eq.f32.partialorder %v1199, %v1228
  %vm1248 = vcmp.eq.f32.partialorder %v1200, %v1230
  %vm1249 = vcmp.eq.f32.partialorder %v1201, %v1232
  %vm1250 = vcmp.eq.f32.partialorder %v1202, %v1234
  %v1251 = vsel %vm1235, %v210, 128
  %v1252 = vsel %vm1236, %v210, 128
  %v1253 = vsel %vm1237, %v210, 128
  %v1254 = vsel %vm1238, %v210, 128
  %v1255 = vsel %vm1239, %v210, 128
  %v1256 = vsel %vm1240, %v210, 128
  %v1257 = vsel %vm1241, %v210, 128
  %v1258 = vsel %vm1242, %v210, 128
  %v1259 = vsel %vm1243, %v210, 128
  %v1260 = vsel %vm1244, %v210, 128
  %v1261 = vsel %vm1245, %v210, 128
  %v1262 = vsel %vm1246, %v210, 128
  %v1263 = vsel %vm1247, %v210, 128
  %v1264 = vsel %vm1248, %v210, 128
  %v1265 = vsel %vm1249, %v210, 128
  %v1266 = vsel %vm1250, %v210, 128
  %v1267 = vand.u32 %v1251, 65535
  %v1268 = vshra.s32 %v1251, 16
  %v1269 = vcvt.s32.f32 %v1267
  %v1270 = vcvt.s32.f32 %v1268
  %1271 = vmin.xlane.f32.xlu0 %v1270
  %v1272 = vpop.xlane.xlu0 %1271
  %vm1273 = vcmp.eq.f32.partialorder %v1270, %v1272
  %v1274 = vsel %vm1273, %v1269, inf
  %1275 = vmin.xlane.f32.xlu0 %v1274
  %v1276 = vpop.xlane.xlu0 %1275
  %v1277 = vcvt.f32.s32 %v1276
  %v1278 = vcvt.f32.s32 %v1272
  %v1279 = vshll.u32 %v1278, 16
  %v1280 = vadd.s32 %v1279, %v1277
  %v1281 = vand.u32 %v1252, 65535
  %v1282 = vshra.s32 %v1252, 16
  %v1283 = vcvt.s32.f32 %v1281
  %v1284 = vcvt.s32.f32 %v1282
  %1285 = vmin.xlane.f32.xlu0 %v1284
  %v1286 = vpop.xlane.xlu0 %1285
  %vm1287 = vcmp.eq.f32.partialorder %v1284, %v1286
  %v1288 = vsel %vm1287, %v1283, inf
  %1289 = vmin.xlane.f32.xlu0 %v1288
  %v1290 = vpop.xlane.xlu0 %1289
  %v1291 = vcvt.f32.s32 %v1290
  %v1292 = vcvt.f32.s32 %v1286
  %v1293 = vshll.u32 %v1292, 16
  %v1294 = vadd.s32 %v1293, %v1291
  %v1295 = vand.u32 %v1253, 65535
  %v1296 = vshra.s32 %v1253, 16
  %v1297 = vcvt.s32.f32 %v1295
  %v1298 = vcvt.s32.f32 %v1296
  %1299 = vmin.xlane.f32.xlu0 %v1298
  %v1300 = vpop.xlane.xlu0 %1299
  %vm1301 = vcmp.eq.f32.partialorder %v1298, %v1300
  %v1302 = vsel %vm1301, %v1297, inf
  %1303 = vmin.xlane.f32.xlu0 %v1302
  %v1304 = vpop.xlane.xlu0 %1303
  %v1305 = vcvt.f32.s32 %v1304
  %v1306 = vcvt.f32.s32 %v1300
  %v1307 = vshll.u32 %v1306, 16
  %v1308 = vadd.s32 %v1307, %v1305
  %v1309 = vand.u32 %v1254, 65535
  %v1310 = vshra.s32 %v1254, 16
  %v1311 = vcvt.s32.f32 %v1309
  %v1312 = vcvt.s32.f32 %v1310
  %1313 = vmin.xlane.f32.xlu0 %v1312
  %v1314 = vpop.xlane.xlu0 %1313
  %vm1315 = vcmp.eq.f32.partialorder %v1312, %v1314
  %v1316 = vsel %vm1315, %v1311, inf
  %1317 = vmin.xlane.f32.xlu0 %v1316
  %v1318 = vpop.xlane.xlu0 %1317
  %v1319 = vcvt.f32.s32 %v1318
  %v1320 = vcvt.f32.s32 %v1314
  %v1321 = vshll.u32 %v1320, 16
  %v1322 = vadd.s32 %v1321, %v1319
  %v1323 = vand.u32 %v1255, 65535
  %v1324 = vshra.s32 %v1255, 16
  %v1325 = vcvt.s32.f32 %v1323
  %v1326 = vcvt.s32.f32 %v1324
  %1327 = vmin.xlane.f32.xlu0 %v1326
  %v1328 = vpop.xlane.xlu0 %1327
  %vm1329 = vcmp.eq.f32.partialorder %v1326, %v1328
  %v1330 = vsel %vm1329, %v1325, inf
  %1331 = vmin.xlane.f32.xlu0 %v1330
  %v1332 = vpop.xlane.xlu0 %1331
  %v1333 = vcvt.f32.s32 %v1332
  %v1334 = vcvt.f32.s32 %v1328
  %v1335 = vshll.u32 %v1334, 16
  %v1336 = vadd.s32 %v1335, %v1333
  %v1337 = vand.u32 %v1256, 65535
  %v1338 = vshra.s32 %v1256, 16
  %v1339 = vcvt.s32.f32 %v1337
  %v1340 = vcvt.s32.f32 %v1338
  %1341 = vmin.xlane.f32.xlu0 %v1340
  %v1342 = vpop.xlane.xlu0 %1341
  %vm1343 = vcmp.eq.f32.partialorder %v1340, %v1342
  %v1344 = vsel %vm1343, %v1339, inf
  %1345 = vmin.xlane.f32.xlu0 %v1344
  %v1346 = vpop.xlane.xlu0 %1345
  %v1347 = vcvt.f32.s32 %v1346
  %v1348 = vcvt.f32.s32 %v1342
  %v1349 = vshll.u32 %v1348, 16
  %v1350 = vadd.s32 %v1349, %v1347
  %v1351 = vand.u32 %v1257, 65535
  %v1352 = vshra.s32 %v1257, 16
  %v1353 = vcvt.s32.f32 %v1351
  %v1354 = vcvt.s32.f32 %v1352
  %1355 = vmin.xlane.f32.xlu0 %v1354
  %v1356 = vpop.xlane.xlu0 %1355
  %vm1357 = vcmp.eq.f32.partialorder %v1354, %v1356
  %v1358 = vsel %vm1357, %v1353, inf
  %1359 = vmin.xlane.f32.xlu0 %v1358
  %v1360 = vpop.xlane.xlu0 %1359
  %v1361 = vcvt.f32.s32 %v1360
  %v1362 = vcvt.f32.s32 %v1356
  %v1363 = vshll.u32 %v1362, 16
  %v1364 = vadd.s32 %v1363, %v1361
  %v1365 = vand.u32 %v1258, 65535
  %v1366 = vshra.s32 %v1258, 16
  %v1367 = vcvt.s32.f32 %v1365
  %v1368 = vcvt.s32.f32 %v1366
  %1369 = vmin.xlane.f32.xlu0 %v1368
  %v1370 = vpop.xlane.xlu0 %1369
  %vm1371 = vcmp.eq.f32.partialorder %v1368, %v1370
  %v1372 = vsel %vm1371, %v1367, inf
  %1373 = vmin.xlane.f32.xlu0 %v1372
  %v1374 = vpop.xlane.xlu0 %1373
  %v1375 = vcvt.f32.s32 %v1374
  %v1376 = vcvt.f32.s32 %v1370
  %v1377 = vshll.u32 %v1376, 16
  %v1378 = vadd.s32 %v1377, %v1375
  %v1379 = vand.u32 %v1259, 65535
  %v1380 = vshra.s32 %v1259, 16
  %v1381 = vcvt.s32.f32 %v1379
  %v1382 = vcvt.s32.f32 %v1380
  %1383 = vmin.xlane.f32.xlu0 %v1382
  %v1384 = vpop.xlane.xlu0 %1383
  %vm1385 = vcmp.eq.f32.partialorder %v1382, %v1384
  %v1386 = vsel %vm1385, %v1381, inf
  %1387 = vmin.xlane.f32.xlu0 %v1386
  %v1388 = vpop.xlane.xlu0 %1387
  %v1389 = vcvt.f32.s32 %v1388
  %v1390 = vcvt.f32.s32 %v1384
  %v1391 = vshll.u32 %v1390, 16
  %v1392 = vadd.s32 %v1391, %v1389
  %v1393 = vand.u32 %v1260, 65535
  %v1394 = vshra.s32 %v1260, 16
  %v1395 = vcvt.s32.f32 %v1393
  %v1396 = vcvt.s32.f32 %v1394
  %1397 = vmin.xlane.f32.xlu0 %v1396
  %v1398 = vpop.xlane.xlu0 %1397
  %vm1399 = vcmp.eq.f32.partialorder %v1396, %v1398
  %v1400 = vsel %vm1399, %v1395, inf
  %1401 = vmin.xlane.f32.xlu0 %v1400
  %v1402 = vpop.xlane.xlu0 %1401
  %v1403 = vcvt.f32.s32 %v1402
  %v1404 = vcvt.f32.s32 %v1398
  %v1405 = vshll.u32 %v1404, 16
  %v1406 = vadd.s32 %v1405, %v1403
  %v1407 = vand.u32 %v1261, 65535
  %v1408 = vshra.s32 %v1261, 16
  %v1409 = vcvt.s32.f32 %v1407
  %v1410 = vcvt.s32.f32 %v1408
  %1411 = vmin.xlane.f32.xlu0 %v1410
  %v1412 = vpop.xlane.xlu0 %1411
  %vm1413 = vcmp.eq.f32.partialorder %v1410, %v1412
  %v1414 = vsel %vm1413, %v1409, inf
  %1415 = vmin.xlane.f32.xlu0 %v1414
  %v1416 = vpop.xlane.xlu0 %1415
  %v1417 = vcvt.f32.s32 %v1416
  %v1418 = vcvt.f32.s32 %v1412
  %v1419 = vshll.u32 %v1418, 16
  %v1420 = vadd.s32 %v1419, %v1417
  %v1421 = vand.u32 %v1262, 65535
  %v1422 = vshra.s32 %v1262, 16
  %v1423 = vcvt.s32.f32 %v1421
  %v1424 = vcvt.s32.f32 %v1422
  %1425 = vmin.xlane.f32.xlu0 %v1424
  %v1426 = vpop.xlane.xlu0 %1425
  %vm1427 = vcmp.eq.f32.partialorder %v1424, %v1426
  %v1428 = vsel %vm1427, %v1423, inf
  %1429 = vmin.xlane.f32.xlu0 %v1428
  %v1430 = vpop.xlane.xlu0 %1429
  %v1431 = vcvt.f32.s32 %v1430
  %v1432 = vcvt.f32.s32 %v1426
  %v1433 = vshll.u32 %v1432, 16
  %v1434 = vadd.s32 %v1433, %v1431
  %v1435 = vand.u32 %v1263, 65535
  %v1436 = vshra.s32 %v1263, 16
  %v1437 = vcvt.s32.f32 %v1435
  %v1438 = vcvt.s32.f32 %v1436
  %1439 = vmin.xlane.f32.xlu0 %v1438
  %v1440 = vpop.xlane.xlu0 %1439
  %vm1441 = vcmp.eq.f32.partialorder %v1438, %v1440
  %v1442 = vsel %vm1441, %v1437, inf
  %1443 = vmin.xlane.f32.xlu0 %v1442
  %v1444 = vpop.xlane.xlu0 %1443
  %v1445 = vcvt.f32.s32 %v1444
  %v1446 = vcvt.f32.s32 %v1440
  %v1447 = vshll.u32 %v1446, 16
  %v1448 = vadd.s32 %v1447, %v1445
  %v1449 = vand.u32 %v1264, 65535
  %v1450 = vshra.s32 %v1264, 16
  %v1451 = vcvt.s32.f32 %v1449
  %v1452 = vcvt.s32.f32 %v1450
  %1453 = vmin.xlane.f32.xlu0 %v1452
  %v1454 = vpop.xlane.xlu0 %1453
  %vm1455 = vcmp.eq.f32.partialorder %v1452, %v1454
  %v1456 = vsel %vm1455, %v1451, inf
  %1457 = vmin.xlane.f32.xlu0 %v1456
  %v1458 = vpop.xlane.xlu0 %1457
  %v1459 = vcvt.f32.s32 %v1458
  %v1460 = vcvt.f32.s32 %v1454
  %v1461 = vshll.u32 %v1460, 16
  %v1462 = vadd.s32 %v1461, %v1459
  %v1463 = vand.u32 %v1265, 65535
  %v1464 = vshra.s32 %v1265, 16
  %v1465 = vcvt.s32.f32 %v1463
  %v1466 = vcvt.s32.f32 %v1464
  %1467 = vmin.xlane.f32.xlu0 %v1466
  %v1468 = vpop.xlane.xlu0 %1467
  %vm1469 = vcmp.eq.f32.partialorder %v1466, %v1468
  %v1470 = vsel %vm1469, %v1465, inf
  %1471 = vmin.xlane.f32.xlu0 %v1470
  %v1472 = vpop.xlane.xlu0 %1471
  %v1473 = vcvt.f32.s32 %v1472
  %v1474 = vcvt.f32.s32 %v1468
  %v1475 = vshll.u32 %v1474, 16
  %v1476 = vadd.s32 %v1475, %v1473
  %v1477 = vand.u32 %v1266, 65535
  %v1478 = vshra.s32 %v1266, 16
  %v1479 = vcvt.s32.f32 %v1477
  %v1480 = vcvt.s32.f32 %v1478
  %1481 = vmin.xlane.f32.xlu0 %v1480
  %v1482 = vpop.xlane.xlu0 %1481
  %vm1483 = vcmp.eq.f32.partialorder %v1480, %v1482
  %v1484 = vsel %vm1483, %v1479, inf
  %1485 = vmin.xlane.f32.xlu0 %v1484
  %v1486 = vpop.xlane.xlu0 %1485
  %v1487 = vcvt.f32.s32 %v1486
  %v1488 = vcvt.f32.s32 %v1482
  %v1489 = vshll.u32 %v1488, 16
  %v1490 = vadd.s32 %v1489, %v1487
  %vm1491 = vcmp.eq.s32.totalorder %v210, %v1280
  %vm1492 = vcmp.eq.s32.totalorder %v210, %v1294
  %vm1493 = vcmp.eq.s32.totalorder %v210, %v1308
  %vm1494 = vcmp.eq.s32.totalorder %v210, %v1322
  %vm1495 = vcmp.eq.s32.totalorder %v210, %v1336
  %vm1496 = vcmp.eq.s32.totalorder %v210, %v1350
  %vm1497 = vcmp.eq.s32.totalorder %v210, %v1364
  %vm1498 = vcmp.eq.s32.totalorder %v210, %v1378
  %vm1499 = vcmp.eq.s32.totalorder %v210, %v1392
  %vm1500 = vcmp.eq.s32.totalorder %v210, %v1406
  %vm1501 = vcmp.eq.s32.totalorder %v210, %v1420
  %vm1502 = vcmp.eq.s32.totalorder %v210, %v1434
  %vm1503 = vcmp.eq.s32.totalorder %v210, %v1448
  %vm1504 = vcmp.eq.s32.totalorder %v210, %v1462
  %vm1505 = vcmp.eq.s32.totalorder %v210, %v1476
  %vm1506 = vcmp.eq.s32.totalorder %v210, %v1490
  %vm1507 = vmor %vm1171, %vm1491
  %vm1508 = vmor %vm1172, %vm1492
  %vm1509 = vmor %vm1173, %vm1493
  %vm1510 = vmor %vm1174, %vm1494
  %vm1511 = vmor %vm1175, %vm1495
  %vm1512 = vmor %vm1176, %vm1496
  %vm1513 = vmor %vm1177, %vm1497
  %vm1514 = vmor %vm1178, %vm1498
  %vm1515 = vmor %vm1179, %vm1499
  %vm1516 = vmor %vm1180, %vm1500
  %vm1517 = vmor %vm1181, %vm1501
  %vm1518 = vmor %vm1182, %vm1502
  %vm1519 = vmor %vm1183, %vm1503
  %vm1520 = vmor %vm1184, %vm1504
  %vm1521 = vmor %vm1185, %vm1505
  %vm1522 = vmor %vm1186, %vm1506
  %v1523 = vsel %vm1491, -inf, %v1187
  %v1524 = vsel %vm1492, -inf, %v1188
  %v1525 = vsel %vm1493, -inf, %v1189
  %v1526 = vsel %vm1494, -inf, %v1190
  %v1527 = vsel %vm1495, -inf, %v1191
  %v1528 = vsel %vm1496, -inf, %v1192
  %v1529 = vsel %vm1497, -inf, %v1193
  %v1530 = vsel %vm1498, -inf, %v1194
  %v1531 = vsel %vm1499, -inf, %v1195
  %v1532 = vsel %vm1500, -inf, %v1196
  %v1533 = vsel %vm1501, -inf, %v1197
  %v1534 = vsel %vm1502, -inf, %v1198
  %v1535 = vsel %vm1503, -inf, %v1199
  %v1536 = vsel %vm1504, -inf, %v1200
  %v1537 = vsel %vm1505, -inf, %v1201
  %v1538 = vsel %vm1506, -inf, %v1202
  %1539 = vmax.xlane.f32.xlu0 %v1523
  %v1540 = vpop.xlane.xlu0 %1539
  %1541 = vmax.xlane.f32.xlu0 %v1524
  %v1542 = vpop.xlane.xlu0 %1541
  %1543 = vmax.xlane.f32.xlu0 %v1525
  %v1544 = vpop.xlane.xlu0 %1543
  %1545 = vmax.xlane.f32.xlu0 %v1526
  %v1546 = vpop.xlane.xlu0 %1545
  %1547 = vmax.xlane.f32.xlu0 %v1527
  %v1548 = vpop.xlane.xlu0 %1547
  %1549 = vmax.xlane.f32.xlu0 %v1528
  %v1550 = vpop.xlane.xlu0 %1549
  %1551 = vmax.xlane.f32.xlu0 %v1529
  %v1552 = vpop.xlane.xlu0 %1551
  %1553 = vmax.xlane.f32.xlu0 %v1530
  %v1554 = vpop.xlane.xlu0 %1553
  %1555 = vmax.xlane.f32.xlu0 %v1531
  %v1556 = vpop.xlane.xlu0 %1555
  %1557 = vmax.xlane.f32.xlu0 %v1532
  %v1558 = vpop.xlane.xlu0 %1557
  %1559 = vmax.xlane.f32.xlu0 %v1533
  %v1560 = vpop.xlane.xlu0 %1559
  %1561 = vmax.xlane.f32.xlu0 %v1534
  %v1562 = vpop.xlane.xlu0 %1561
  %1563 = vmax.xlane.f32.xlu0 %v1535
  %v1564 = vpop.xlane.xlu0 %1563
  %1565 = vmax.xlane.f32.xlu0 %v1536
  %v1566 = vpop.xlane.xlu0 %1565
  %1567 = vmax.xlane.f32.xlu0 %v1537
  %v1568 = vpop.xlane.xlu0 %1567
  %1569 = vmax.xlane.f32.xlu0 %v1538
  %v1570 = vpop.xlane.xlu0 %1569
  %vm1571 = vcmp.eq.f32.partialorder %v1523, %v1540
  %vm1572 = vcmp.eq.f32.partialorder %v1524, %v1542
  %vm1573 = vcmp.eq.f32.partialorder %v1525, %v1544
  %vm1574 = vcmp.eq.f32.partialorder %v1526, %v1546
  %vm1575 = vcmp.eq.f32.partialorder %v1527, %v1548
  %vm1576 = vcmp.eq.f32.partialorder %v1528, %v1550
  %vm1577 = vcmp.eq.f32.partialorder %v1529, %v1552
  %vm1578 = vcmp.eq.f32.partialorder %v1530, %v1554
  %vm1579 = vcmp.eq.f32.partialorder %v1531, %v1556
  %vm1580 = vcmp.eq.f32.partialorder %v1532, %v1558
  %vm1581 = vcmp.eq.f32.partialorder %v1533, %v1560
  %vm1582 = vcmp.eq.f32.partialorder %v1534, %v1562
  %vm1583 = vcmp.eq.f32.partialorder %v1535, %v1564
  %vm1584 = vcmp.eq.f32.partialorder %v1536, %v1566
  %vm1585 = vcmp.eq.f32.partialorder %v1537, %v1568
  %vm1586 = vcmp.eq.f32.partialorder %v1538, %v1570
  %v1587 = vsel %vm1571, %v210, 128
  %v1588 = vsel %vm1572, %v210, 128
  %v1589 = vsel %vm1573, %v210, 128
  %v1590 = vsel %vm1574, %v210, 128
  %v1591 = vsel %vm1575, %v210, 128
  %v1592 = vsel %vm1576, %v210, 128
  %v1593 = vsel %vm1577, %v210, 128
  %v1594 = vsel %vm1578, %v210, 128
  %v1595 = vsel %vm1579, %v210, 128
  %v1596 = vsel %vm1580, %v210, 128
  %v1597 = vsel %vm1581, %v210, 128
  %v1598 = vsel %vm1582, %v210, 128
  %v1599 = vsel %vm1583, %v210, 128
  %v1600 = vsel %vm1584, %v210, 128
  %v1601 = vsel %vm1585, %v210, 128
  %v1602 = vsel %vm1586, %v210, 128
  %v1603 = vand.u32 %v1587, 65535
  %v1604 = vshra.s32 %v1587, 16
  %v1605 = vcvt.s32.f32 %v1603
  %v1606 = vcvt.s32.f32 %v1604
  %1607 = vmin.xlane.f32.xlu0 %v1606
  %v1608 = vpop.xlane.xlu0 %1607
  %vm1609 = vcmp.eq.f32.partialorder %v1606, %v1608
  %v1610 = vsel %vm1609, %v1605, inf
  %1611 = vmin.xlane.f32.xlu0 %v1610
  %v1612 = vpop.xlane.xlu0 %1611
  %v1613 = vcvt.f32.s32 %v1612
  %v1614 = vcvt.f32.s32 %v1608
  %v1615 = vshll.u32 %v1614, 16
  %v1616 = vadd.s32 %v1615, %v1613
  %v1617 = vand.u32 %v1588, 65535
  %v1618 = vshra.s32 %v1588, 16
  %v1619 = vcvt.s32.f32 %v1617
  %v1620 = vcvt.s32.f32 %v1618
  %1621 = vmin.xlane.f32.xlu0 %v1620
  %v1622 = vpop.xlane.xlu0 %1621
  %vm1623 = vcmp.eq.f32.partialorder %v1620, %v1622
  %v1624 = vsel %vm1623, %v1619, inf
  %1625 = vmin.xlane.f32.xlu0 %v1624
  %v1626 = vpop.xlane.xlu0 %1625
  %v1627 = vcvt.f32.s32 %v1626
  %v1628 = vcvt.f32.s32 %v1622
  %v1629 = vshll.u32 %v1628, 16
  %v1630 = vadd.s32 %v1629, %v1627
  %v1631 = vand.u32 %v1589, 65535
  %v1632 = vshra.s32 %v1589, 16
  %v1633 = vcvt.s32.f32 %v1631
  %v1634 = vcvt.s32.f32 %v1632
  %1635 = vmin.xlane.f32.xlu0 %v1634
  %v1636 = vpop.xlane.xlu0 %1635
  %vm1637 = vcmp.eq.f32.partialorder %v1634, %v1636
  %v1638 = vsel %vm1637, %v1633, inf
  %1639 = vmin.xlane.f32.xlu0 %v1638
  %v1640 = vpop.xlane.xlu0 %1639
  %v1641 = vcvt.f32.s32 %v1640
  %v1642 = vcvt.f32.s32 %v1636
  %v1643 = vshll.u32 %v1642, 16
  %v1644 = vadd.s32 %v1643, %v1641
  %v1645 = vand.u32 %v1590, 65535
  %v1646 = vshra.s32 %v1590, 16
  %v1647 = vcvt.s32.f32 %v1645
  %v1648 = vcvt.s32.f32 %v1646
  %1649 = vmin.xlane.f32.xlu0 %v1648
  %v1650 = vpop.xlane.xlu0 %1649
  %vm1651 = vcmp.eq.f32.partialorder %v1648, %v1650
  %v1652 = vsel %vm1651, %v1647, inf
  %1653 = vmin.xlane.f32.xlu0 %v1652
  %v1654 = vpop.xlane.xlu0 %1653
  %v1655 = vcvt.f32.s32 %v1654
  %v1656 = vcvt.f32.s32 %v1650
  %v1657 = vshll.u32 %v1656, 16
  %v1658 = vadd.s32 %v1657, %v1655
  %v1659 = vand.u32 %v1591, 65535
  %v1660 = vshra.s32 %v1591, 16
  %v1661 = vcvt.s32.f32 %v1659
  %v1662 = vcvt.s32.f32 %v1660
  %1663 = vmin.xlane.f32.xlu0 %v1662
  %v1664 = vpop.xlane.xlu0 %1663
  %vm1665 = vcmp.eq.f32.partialorder %v1662, %v1664
  %v1666 = vsel %vm1665, %v1661, inf
  %1667 = vmin.xlane.f32.xlu0 %v1666
  %v1668 = vpop.xlane.xlu0 %1667
  %v1669 = vcvt.f32.s32 %v1668
  %v1670 = vcvt.f32.s32 %v1664
  %v1671 = vshll.u32 %v1670, 16
  %v1672 = vadd.s32 %v1671, %v1669
  %v1673 = vand.u32 %v1592, 65535
  %v1674 = vshra.s32 %v1592, 16
  %v1675 = vcvt.s32.f32 %v1673
  %v1676 = vcvt.s32.f32 %v1674
  %1677 = vmin.xlane.f32.xlu0 %v1676
  %v1678 = vpop.xlane.xlu0 %1677
  %vm1679 = vcmp.eq.f32.partialorder %v1676, %v1678
  %v1680 = vsel %vm1679, %v1675, inf
  %1681 = vmin.xlane.f32.xlu0 %v1680
  %v1682 = vpop.xlane.xlu0 %1681
  %v1683 = vcvt.f32.s32 %v1682
  %v1684 = vcvt.f32.s32 %v1678
  %v1685 = vshll.u32 %v1684, 16
  %v1686 = vadd.s32 %v1685, %v1683
  %v1687 = vand.u32 %v1593, 65535
  %v1688 = vshra.s32 %v1593, 16
  %v1689 = vcvt.s32.f32 %v1687
  %v1690 = vcvt.s32.f32 %v1688
  %1691 = vmin.xlane.f32.xlu0 %v1690
  %v1692 = vpop.xlane.xlu0 %1691
  %vm1693 = vcmp.eq.f32.partialorder %v1690, %v1692
  %v1694 = vsel %vm1693, %v1689, inf
  %1695 = vmin.xlane.f32.xlu0 %v1694
  %v1696 = vpop.xlane.xlu0 %1695
  %v1697 = vcvt.f32.s32 %v1696
  %v1698 = vcvt.f32.s32 %v1692
  %v1699 = vshll.u32 %v1698, 16
  %v1700 = vadd.s32 %v1699, %v1697
  %v1701 = vand.u32 %v1594, 65535
  %v1702 = vshra.s32 %v1594, 16
  %v1703 = vcvt.s32.f32 %v1701
  %v1704 = vcvt.s32.f32 %v1702
  %1705 = vmin.xlane.f32.xlu0 %v1704
  %v1706 = vpop.xlane.xlu0 %1705
  %vm1707 = vcmp.eq.f32.partialorder %v1704, %v1706
  %v1708 = vsel %vm1707, %v1703, inf
  %1709 = vmin.xlane.f32.xlu0 %v1708
  %v1710 = vpop.xlane.xlu0 %1709
  %v1711 = vcvt.f32.s32 %v1710
  %v1712 = vcvt.f32.s32 %v1706
  %v1713 = vshll.u32 %v1712, 16
  %v1714 = vadd.s32 %v1713, %v1711
  %v1715 = vand.u32 %v1595, 65535
  %v1716 = vshra.s32 %v1595, 16
  %v1717 = vcvt.s32.f32 %v1715
  %v1718 = vcvt.s32.f32 %v1716
  %1719 = vmin.xlane.f32.xlu0 %v1718
  %v1720 = vpop.xlane.xlu0 %1719
  %vm1721 = vcmp.eq.f32.partialorder %v1718, %v1720
  %v1722 = vsel %vm1721, %v1717, inf
  %1723 = vmin.xlane.f32.xlu0 %v1722
  %v1724 = vpop.xlane.xlu0 %1723
  %v1725 = vcvt.f32.s32 %v1724
  %v1726 = vcvt.f32.s32 %v1720
  %v1727 = vshll.u32 %v1726, 16
  %v1728 = vadd.s32 %v1727, %v1725
  %v1729 = vand.u32 %v1596, 65535
  %v1730 = vshra.s32 %v1596, 16
  %v1731 = vcvt.s32.f32 %v1729
  %v1732 = vcvt.s32.f32 %v1730
  %1733 = vmin.xlane.f32.xlu0 %v1732
  %v1734 = vpop.xlane.xlu0 %1733
  %vm1735 = vcmp.eq.f32.partialorder %v1732, %v1734
  %v1736 = vsel %vm1735, %v1731, inf
  %1737 = vmin.xlane.f32.xlu0 %v1736
  %v1738 = vpop.xlane.xlu0 %1737
  %v1739 = vcvt.f32.s32 %v1738
  %v1740 = vcvt.f32.s32 %v1734
  %v1741 = vshll.u32 %v1740, 16
  %v1742 = vadd.s32 %v1741, %v1739
  %v1743 = vand.u32 %v1597, 65535
  %v1744 = vshra.s32 %v1597, 16
  %v1745 = vcvt.s32.f32 %v1743
  %v1746 = vcvt.s32.f32 %v1744
  %1747 = vmin.xlane.f32.xlu0 %v1746
  %v1748 = vpop.xlane.xlu0 %1747
  %vm1749 = vcmp.eq.f32.partialorder %v1746, %v1748
  %v1750 = vsel %vm1749, %v1745, inf
  %1751 = vmin.xlane.f32.xlu0 %v1750
  %v1752 = vpop.xlane.xlu0 %1751
  %v1753 = vcvt.f32.s32 %v1752
  %v1754 = vcvt.f32.s32 %v1748
  %v1755 = vshll.u32 %v1754, 16
  %v1756 = vadd.s32 %v1755, %v1753
  %v1757 = vand.u32 %v1598, 65535
  %v1758 = vshra.s32 %v1598, 16
  %v1759 = vcvt.s32.f32 %v1757
  %v1760 = vcvt.s32.f32 %v1758
  %1761 = vmin.xlane.f32.xlu0 %v1760
  %v1762 = vpop.xlane.xlu0 %1761
  %vm1763 = vcmp.eq.f32.partialorder %v1760, %v1762
  %v1764 = vsel %vm1763, %v1759, inf
  %1765 = vmin.xlane.f32.xlu0 %v1764
  %v1766 = vpop.xlane.xlu0 %1765
  %v1767 = vcvt.f32.s32 %v1766
  %v1768 = vcvt.f32.s32 %v1762
  %v1769 = vshll.u32 %v1768, 16
  %v1770 = vadd.s32 %v1769, %v1767
  %v1771 = vand.u32 %v1599, 65535
  %v1772 = vshra.s32 %v1599, 16
  %v1773 = vcvt.s32.f32 %v1771
  %v1774 = vcvt.s32.f32 %v1772
  %1775 = vmin.xlane.f32.xlu0 %v1774
  %v1776 = vpop.xlane.xlu0 %1775
  %vm1777 = vcmp.eq.f32.partialorder %v1774, %v1776
  %v1778 = vsel %vm1777, %v1773, inf
  %1779 = vmin.xlane.f32.xlu0 %v1778
  %v1780 = vpop.xlane.xlu0 %1779
  %v1781 = vcvt.f32.s32 %v1780
  %v1782 = vcvt.f32.s32 %v1776
  %v1783 = vshll.u32 %v1782, 16
  %v1784 = vadd.s32 %v1783, %v1781
  %v1785 = vand.u32 %v1600, 65535
  %v1786 = vshra.s32 %v1600, 16
  %v1787 = vcvt.s32.f32 %v1785
  %v1788 = vcvt.s32.f32 %v1786
  %1789 = vmin.xlane.f32.xlu0 %v1788
  %v1790 = vpop.xlane.xlu0 %1789
  %vm1791 = vcmp.eq.f32.partialorder %v1788, %v1790
  %v1792 = vsel %vm1791, %v1787, inf
  %1793 = vmin.xlane.f32.xlu0 %v1792
  %v1794 = vpop.xlane.xlu0 %1793
  %v1795 = vcvt.f32.s32 %v1794
  %v1796 = vcvt.f32.s32 %v1790
  %v1797 = vshll.u32 %v1796, 16
  %v1798 = vadd.s32 %v1797, %v1795
  %v1799 = vand.u32 %v1601, 65535
  %v1800 = vshra.s32 %v1601, 16
  %v1801 = vcvt.s32.f32 %v1799
  %v1802 = vcvt.s32.f32 %v1800
  %1803 = vmin.xlane.f32.xlu0 %v1802
  %v1804 = vpop.xlane.xlu0 %1803
  %vm1805 = vcmp.eq.f32.partialorder %v1802, %v1804
  %v1806 = vsel %vm1805, %v1801, inf
  %1807 = vmin.xlane.f32.xlu0 %v1806
  %v1808 = vpop.xlane.xlu0 %1807
  %v1809 = vcvt.f32.s32 %v1808
  %v1810 = vcvt.f32.s32 %v1804
  %v1811 = vshll.u32 %v1810, 16
  %v1812 = vadd.s32 %v1811, %v1809
  %v1813 = vand.u32 %v1602, 65535
  %v1814 = vshra.s32 %v1602, 16
  %v1815 = vcvt.s32.f32 %v1813
  %v1816 = vcvt.s32.f32 %v1814
  %1817 = vmin.xlane.f32.xlu0 %v1816
  %v1818 = vpop.xlane.xlu0 %1817
  %vm1819 = vcmp.eq.f32.partialorder %v1816, %v1818
  %v1820 = vsel %vm1819, %v1815, inf
  %1821 = vmin.xlane.f32.xlu0 %v1820
  %v1822 = vpop.xlane.xlu0 %1821
  %v1823 = vcvt.f32.s32 %v1822
  %v1824 = vcvt.f32.s32 %v1818
  %v1825 = vshll.u32 %v1824, 16
  %v1826 = vadd.s32 %v1825, %v1823
  %vm1827 = vcmp.eq.s32.totalorder %v210, %v1616
  %vm1828 = vcmp.eq.s32.totalorder %v210, %v1630
  %vm1829 = vcmp.eq.s32.totalorder %v210, %v1644
  %vm1830 = vcmp.eq.s32.totalorder %v210, %v1658
  %vm1831 = vcmp.eq.s32.totalorder %v210, %v1672
  %vm1832 = vcmp.eq.s32.totalorder %v210, %v1686
  %vm1833 = vcmp.eq.s32.totalorder %v210, %v1700
  %vm1834 = vcmp.eq.s32.totalorder %v210, %v1714
  %vm1835 = vcmp.eq.s32.totalorder %v210, %v1728
  %vm1836 = vcmp.eq.s32.totalorder %v210, %v1742
  %vm1837 = vcmp.eq.s32.totalorder %v210, %v1756
  %vm1838 = vcmp.eq.s32.totalorder %v210, %v1770
  %vm1839 = vcmp.eq.s32.totalorder %v210, %v1784
  %vm1840 = vcmp.eq.s32.totalorder %v210, %v1798
  %vm1841 = vcmp.eq.s32.totalorder %v210, %v1812
  %vm1842 = vcmp.eq.s32.totalorder %v210, %v1826
  %vm1843 = vmor %vm1507, %vm1827
  %vm1844 = vmor %vm1508, %vm1828
  %vm1845 = vmor %vm1509, %vm1829
  %vm1846 = vmor %vm1510, %vm1830
  %vm1847 = vmor %vm1511, %vm1831
  %vm1848 = vmor %vm1512, %vm1832
  %vm1849 = vmor %vm1513, %vm1833
  %vm1850 = vmor %vm1514, %vm1834
  %vm1851 = vmor %vm1515, %vm1835
  %vm1852 = vmor %vm1516, %vm1836
  %vm1853 = vmor %vm1517, %vm1837
  %vm1854 = vmor %vm1518, %vm1838
  %vm1855 = vmor %vm1519, %vm1839
  %vm1856 = vmor %vm1520, %vm1840
  %vm1857 = vmor %vm1521, %vm1841
  %vm1858 = vmor %vm1522, %vm1842
  %v1859 = vsel %vm1843, 1, 0
  %v1860 = vsel %vm1844, 1, 0
  %v1861 = vsel %vm1845, 1, 0
  %v1862 = vsel %vm1846, 1, 0
  %v1863 = vsel %vm1847, 1, 0
  %v1864 = vsel %vm1848, 1, 0
  %v1865 = vsel %vm1849, 1, 0
  %v1866 = vsel %vm1850, 1, 0
  %v1867 = vsel %vm1851, 1, 0
  %v1868 = vsel %vm1852, 1, 0
  %v1869 = vsel %vm1853, 1, 0
  %v1870 = vsel %vm1854, 1, 0
  %v1871 = vsel %vm1855, 1, 0
  %v1872 = vsel %vm1856, 1, 0
  %v1873 = vsel %vm1857, 1, 0
  %v1874 = vsel %vm1858, 1, 0
  %v1875 = vcvt.s32.f32 %v1859
  %v1876 = vcvt.s32.f32 %v1860
  %v1877 = vcvt.s32.f32 %v1861
  %v1878 = vcvt.s32.f32 %v1862
  %v1879 = vcvt.s32.f32 %v1863
  %v1880 = vcvt.s32.f32 %v1864
  %v1881 = vcvt.s32.f32 %v1865
  %v1882 = vcvt.s32.f32 %v1866
  %v1883 = vcvt.s32.f32 %v1867
  %v1884 = vcvt.s32.f32 %v1868
  %v1885 = vcvt.s32.f32 %v1869
  %v1886 = vcvt.s32.f32 %v1870
  %v1887 = vcvt.s32.f32 %v1871
  %v1888 = vcvt.s32.f32 %v1872
  %v1889 = vcvt.s32.f32 %v1873
  %v1890 = vcvt.s32.f32 %v1874
  %v1891 = vadd.f32 %v1875, %v1876
  %v1892 = vadd.f32 %v1891, %v1877
  %v1893 = vadd.f32 %v1892, %v1878
  %v1894 = vadd.f32 %v1893, %v1879
  %v1895 = vadd.f32 %v1894, %v1880
  %v1896 = vadd.f32 %v1895, %v1881
  %v1897 = vadd.f32 %v1896, %v1882
  %v1898 = vadd.f32 %v1897, %v1883
  %v1899 = vadd.f32 %v1898, %v1884
  %v1900 = vadd.f32 %v1899, %v1885
  %v1901 = vadd.f32 %v1900, %v1886
  %v1902 = vadd.f32 %v1901, %v1887
  %v1903 = vadd.f32 %v1902, %v1888
  %v1904 = vadd.f32 %v1903, %v1889
  %v1905 = vadd.f32 %v1904, %v1890
  %v1906 = vrot.slane %v1905, 4
  %v1907 = vadd.f32 %v1905, %v1906
  %v1908 = vrot.slane %v1907, 2
  %v1909 = vadd.f32 %v1907, %v1908
  %v1910 = vrot.slane %v1909, 1
  %v1911 = vadd.f32 %v1909, %v1910
  %v1912 = vmax.f32 %v1911, 1e-08
  %v1913 = vrcp.pop %v1912
  %v1914 = vmul.f32 %v1912, %v1913
  %v1915 = vsub.f32 1.0, %v1914
  %v1916 = vmul.f32 %v1913, %v1915
  %v1917 = vadd.f32 %v1913, %v1916
  %vm1918 = vweird.f32 %v1912
  %vm1919 = vweird.f32 %v1913
  %vm1920 = vmor %vm1918, %vm1919
  %v1921 = vsel %vm1920, %v1913, %v1917
  %v1922 = vand.u32 2147483647, %v1912
  %vm1923 = vcmp.eq.f32.partialorder %v1922, 8.507059e+37
  %v1924 = vand.u32 %v1912, 2147483648
  %v1925 = vor.u32 1.1754944e-38, %v1924
  %v1926 = vsel %vm1923, %v1925, %v1921
  %v1927 = vmul.f32 1.0, %v1926
  %v1928 = vmul.f32 %v1875, %v1927
  %v1929 = vmul.f32 %v1876, %v1927
  %v1930 = vmul.f32 %v1877, %v1927
  %v1931 = vmul.f32 %v1878, %v1927
  %v1932 = vmul.f32 %v1879, %v1927
  %v1933 = vmul.f32 %v1880, %v1927
  %v1934 = vmul.f32 %v1881, %v1927
  %v1935 = vmul.f32 %v1882, %v1927
  %v1936 = vmul.f32 %v1883, %v1927
  %v1937 = vmul.f32 %v1884, %v1927
  %v1938 = vmul.f32 %v1885, %v1927
  %v1939 = vmul.f32 %v1886, %v1927
  %v1940 = vmul.f32 %v1887, %v1927
  %v1941 = vmul.f32 %v1888, %v1927
  %v1942 = vmul.f32 %v1889, %v1927
  %v1943 = vmul.f32 %v1890, %v1927
  %v1944 = vld [vmem:[%s1] sm:$0xff]
  %v1945 = vld [vmem:[%s1 + $0x8] sm:$0xff]
  %v1946 = vld [vmem:[%s1 + $0x10] sm:$0xff]
  %v1947 = vld [vmem:[%s1 + $0x18] sm:$0xff]
  %v1948 = vld [vmem:[%s1 + $0x20] sm:$0xff]
  %v1949 = vld [vmem:[%s1 + $0x28] sm:$0xff]
  %v1950 = vld [vmem:[%s1 + $0x30] sm:$0xff]
  %v1951 = vld [vmem:[%s1 + $0x38] sm:$0xff]
  %v1952 = vld [vmem:[%s1 + $0x40] sm:$0xff]
  %v1953 = vld [vmem:[%s1 + $0x48] sm:$0xff]
  %v1954 = vld [vmem:[%s1 + $0x50] sm:$0xff]
  %v1955 = vld [vmem:[%s1 + $0x58] sm:$0xff]
  %v1956 = vld [vmem:[%s1 + $0x60] sm:$0xff]
  %v1957 = vld [vmem:[%s1 + $0x68] sm:$0xff]
  %v1958 = vld [vmem:[%s1 + $0x70] sm:$0xff]
  %v1959 = vld [vmem:[%s1 + $0x78] sm:$0xff]
  %1960 = vmatpush.xpose.msra.mxu0 %v1890
  %1961 = vmatpush.xpose.msra.mxu0 %v1889
  %1962 = vmatpush.xpose.msra.mxu0 %v1888
  %1963 = vmatpush.xpose.msra.mxu0 %v1887
  %1964 = vmatpush.xpose.msra.mxu0 %v1886
  %1965 = vmatpush.xpose.msra.mxu0 %v1885
  %1966 = vmatpush.xpose.msra.mxu0 %v1884
  %1967 = vmatpush.xpose.msra.mxu0 %v1883
  %1968 = vmatpush.xpose.msra.mxu0 %v1882
  %1969 = vmatpush.xpose.msra.mxu0 %v1881
  %1970 = vmatpush.xpose.msra.mxu0 %v1880
  %1971 = vmatpush.xpose.msra.mxu0 %v1879
  %1972 = vmatpush.xpose.msra.mxu0 %v1878
  %1973 = vmatpush.xpose.msra.mxu0 %v1877
  %1974 = vmatpush.xpose.msra.mxu0 %v1876
  %1975 = vmatpush.xpose.msra.mxu0 %v1875
  %1976 = vmatmul.f32.gmra.mxu0 %v1928
  %v1977 = vpop.f32.mrf.mxu0
  %v1978 = vadd.f32 %v1944, %v1977
  %1979 = vmatmul.f32.gmra.mxu0 %v1929
  %v1980 = vpop.f32.mrf.mxu0
  %v1981 = vadd.f32 %v1945, %v1980
  %1982 = vmatmul.f32.gmra.mxu0 %v1930
  %v1983 = vpop.f32.mrf.mxu0
  %v1984 = vadd.f32 %v1946, %v1983
  %1985 = vmatmul.f32.gmra.mxu0 %v1931
  %v1986 = vpop.f32.mrf.mxu0
  %v1987 = vadd.f32 %v1947, %v1986
  %1988 = vmatmul.f32.gmra.mxu0 %v1932
  %v1989 = vpop.f32.mrf.mxu0
  %v1990 = vadd.f32 %v1948, %v1989
  %1991 = vmatmul.f32.gmra.mxu0 %v1933
  %v1992 = vpop.f32.mrf.mxu0
  %v1993 = vadd.f32 %v1949, %v1992
  %1994 = vmatmul.f32.gmra.mxu0 %v1934
  %v1995 = vpop.f32.mrf.mxu0
  %v1996 = vadd.f32 %v1950, %v1995
  %1997 = vmatmul.f32.gmra.mxu0 %v1935
  %v1998 = vpop.f32.mrf.mxu0
  %v1999 = vadd.f32 %v1951, %v1998
  %2000 = vmatmul.f32.gmra.mxu0 %v1936
  %v2001 = vpop.f32.mrf.mxu0
  %v2002 = vadd.f32 %v1952, %v2001
  %2003 = vmatmul.f32.gmra.mxu0 %v1937
  %v2004 = vpop.f32.mrf.mxu0
  %v2005 = vadd.f32 %v1953, %v2004
  %2006 = vmatmul.f32.gmra.mxu0 %v1938
  %v2007 = vpop.f32.mrf.mxu0
  %v2008 = vadd.f32 %v1954, %v2007
  %2009 = vmatmul.f32.gmra.mxu0 %v1939
  %v2010 = vpop.f32.mrf.mxu0
  %v2011 = vadd.f32 %v1955, %v2010
  %2012 = vmatmul.f32.gmra.mxu0 %v1940
  %v2013 = vpop.f32.mrf.mxu0
  %v2014 = vadd.f32 %v1956, %v2013
  %2015 = vmatmul.f32.gmra.mxu0 %v1941
  %v2016 = vpop.f32.mrf.mxu0
  %v2017 = vadd.f32 %v1957, %v2016
  %2018 = vmatmul.f32.gmra.mxu0 %v1942
  %v2019 = vpop.f32.mrf.mxu0
  %v2020 = vadd.f32 %v1958, %v2019
  %2021 = vmatmul.f32.gmra.mxu0 %v1943
  %v2022 = vpop.f32.mrf.mxu0
  %v2023 = vadd.f32 %v1959, %v2022
  %2024 = vdwg.mxu0
  %v2025 = vld [vmem:[%s4] sm:$0xff]
  %v2026 = vld [vmem:[%s4 + $0x8] sm:$0xff]
  %v2027 = vld [vmem:[%s2] sm:$0x1]
  %v2028 = vld [vmem:[%s3] sm:$0xff]
  %v2029 = vld [vmem:[%s3 + $0x8] sm:$0xff]
  %2031 = vset.pattern.permute.xlu0 0
  %2032 = vperm.xlu0 %2031, %v2025
  %v2033 = vpop.permute.xlu0 %2032
  %2036 = vset.pattern.permute.xlu0 0
  %2037 = vperm.xlu0 %2036, %v2026
  %v2038 = vpop.permute.xlu0 %2037
  %v2041 = vsel %vm54, %v2028, 0
  %v2044 = vsel %vm54, %v2029, 0
  %2046 = vmatpush.msra.mxu0 0.0
  %2047 = vmatpush.msra.mxu0 0.0
  %2048 = vmatpush.msra.mxu0 0.0
  %2049 = vmatpush.msra.mxu0 0.0
  %2050 = vmatpush.msra.mxu0 0.0
  %2051 = vmatpush.msra.mxu0 0.0
  %2052 = vmatpush.msra.mxu0 0.0
  %2053 = vmatpush.msra.mxu0 0.0
  %2054 = vmatpush.msra.mxu0 0.0
  %2055 = vmatpush.msra.mxu0 0.0
  %2056 = vmatpush.msra.mxu0 0.0
  %2057 = vmatpush.msra.mxu0 0.0
  %2058 = vmatpush.msra.mxu0 0.0
  %2059 = vmatpush.msra.mxu0 0.0
  %2060 = vmatpush.msra.mxu0 %v21
  %2061 = vmatpush.msra.mxu0 %v20
  %2062 = vmatmul.f32.gmra.mxu0 %v2041
  %v2063 = vpop.f32.mrf.mxu0
  %v2064 = vadd.f32 %v2033, %v2063
  %2065 = vmatmul.f32.gmra.mxu0 %v2044
  %v2066 = vpop.f32.mrf.mxu0
  %v2067 = vadd.f32 %v2038, %v2066
  %2068 = vdwg.mxu0
  %v2070 = vperm.slane %v2027, 0
  %v2072 = vmul.f32 %v2064, %v2070
  %v2073 = vmul.f32 %v2067, %v2070
  %2074 = vmatpush.msra.mxu0 %v2023
  %2075 = vmatpush.msra.mxu0 %v2020
  %2076 = vmatpush.msra.mxu0 %v2017
  %2077 = vmatpush.msra.mxu0 %v2014
  %2078 = vmatpush.msra.mxu0 %v2011
  %2079 = vmatpush.msra.mxu0 %v2008
  %2080 = vmatpush.msra.mxu0 %v2005
  %2081 = vmatpush.msra.mxu0 %v2002
  %2082 = vmatpush.msra.mxu0 %v1999
  %2083 = vmatpush.msra.mxu0 %v1996
  %2084 = vmatpush.msra.mxu0 %v1993
  %2085 = vmatpush.msra.mxu0 %v1990
  %2086 = vmatpush.msra.mxu0 %v1987
  %2087 = vmatpush.msra.mxu0 %v1984
  %2088 = vmatpush.msra.mxu0 %v1981
  %2089 = vmatpush.msra.mxu0 %v1978
  %2090 = vmatmul.f32.gmra.mxu0 %v2072
  %v2091 = vpop.f32.mrf.mxu0
  %v2092 = vadd.f32 0.0, %v2091
  %2093 = vmatmul.f32.gmra.mxu0 %v2073
  %v2094 = vpop.f32.mrf.mxu0
  %v2095 = vadd.f32 0.0, %v2094
  %2096 = vdwg.mxu0
  %v2097 = vmul.f32 %v2092, %v2070
  %v2098 = vmul.f32 %v2095, %v2070
  %2099 = vadd.xlane.f32.xlu0 %v2097
  %v2100 = vpop.xlane.xlu0 %2099
  %2101 = vadd.xlane.f32.xlu0 %v2098
  %v2102 = vpop.xlane.xlu0 %2101
  %v2103 = vrcp.pop 128.0
  %v2104 = vmul.f32 128.0, %v2103
  %v2105 = vsub.f32 1.0, %v2104
  %v2106 = vmul.f32 %v2103, %v2105
  %v2107 = vadd.f32 %v2103, %v2106
  %vm2108 = vweird.f32 %v2103
  %v2109 = vsel %vm2108, %v2103, %v2107
  %v2110 = vmul.f32 %v2100, %v2109
  %v2111 = vmul.f32 %v2102, %v2109
  %v2112 = vsub.f32 %v2097, %v2110
  %v2113 = vsub.f32 %v2098, %v2111
  %v2114 = vmul.f32 %v2112, %v2112
  %v2115 = vmul.f32 %v2113, %v2113
  %2116 = vadd.xlane.f32.xlu0 %v2114
  %v2117 = vpop.xlane.xlu0 %2116
  %2118 = vadd.xlane.f32.xlu0 %v2115
  %v2119 = vpop.xlane.xlu0 %2118
  %v2120 = vmul.f32 %v2117, %v2109
  %v2121 = vmul.f32 %v2119, %v2109
  %v2122 = vadd.f32 %v2120, 1e-05
  %v2123 = vadd.f32 %v2121, 1e-05
  %v2124 = vrsqrt.pop %v2122
  %v2125 = vmul.f32 %v2124, %v2122
  %v2126 = vmul.f32 %v2125, %v2124
  %v2127 = vmul.f32 0.5, %v2126
  %v2128 = vsub.f32 1.5, %v2127
  %v2129 = vmul.f32 %v2124, %v2128
  %vm2130 = vweird.f32 %v2122
  %vm2131 = vweird.f32 %v2124
  %vm2132 = vmor %vm2130, %vm2131
  %v2133 = vsel %vm2132, %v2124, %v2129
  %v2134 = vrsqrt.pop %v2123
  %v2135 = vmul.f32 %v2134, %v2123
  %v2136 = vmul.f32 %v2135, %v2134
  %v2137 = vmul.f32 0.5, %v2136
  %v2138 = vsub.f32 1.5, %v2137
  %v2139 = vmul.f32 %v2134, %v2138
  %vm2140 = vweird.f32 %v2123
  %vm2141 = vweird.f32 %v2134
  %vm2142 = vmor %vm2140, %vm2141
  %v2143 = vsel %vm2142, %v2134, %v2139
  %v2144 = vmul.f32 %v2112, %v2133
  %v2145 = vmul.f32 %v2113, %v2143
  %2146 = vset.pattern.permute.xlu0 1
  %2147 = vperm.xlu0 %2146, %v2025
  %v2148 = vpop.permute.xlu0 %2147
  %2150 = vset.pattern.permute.xlu0 1
  %2151 = vperm.xlu0 %2150, %v2026
  %v2152 = vpop.permute.xlu0 %2151
  %v2154 = vmul.f32 %v2144, %v2148
  %v2155 = vmul.f32 %v2145, %v2152
  %2156 = vset.pattern.permute.xlu0 2
  %2157 = vperm.xlu0 %2156, %v2025
  %v2158 = vpop.permute.xlu0 %2157
  %2160 = vset.pattern.permute.xlu0 2
  %2161 = vperm.xlu0 %2160, %v2026
  %v2162 = vpop.permute.xlu0 %2161
  %v2164 = vadd.f32 %v2154, %v2158
  %v2165 = vadd.f32 %v2155, %v2162
  %v2166 = vmax.f32 %v2164, 0.0
  %v2167 = vmax.f32 %v2165, 0.0
  %v2168 = vadd.f32 %v2166, %v20
  %v2169 = vadd.f32 %v2167, %v21
  %2170 = vst [vmem:[%s5] sm:$0xff] %v2168
  %2171 = vst [vmem:[%s5 + $0x8] sm:$0xff] %v2169
  // Predicated region
  $region22: #{g_hypernet_forward.1} parent=0 // pred_check
    _
  $region23: #{g_hypernet_forward.1} parent=0 // pred_check_branch
    %2173 = sbr.rel (0) target = $region25
  $region24: #{g_hypernet_forward.1} parent=0 // pred_region
    _
  $region25: #{g_hypernet_forward.1} parent=0 // pred_fallthru
    _
  // Predicated region
  $region26: #{g_hypernet_forward.1} parent=0 // pred_check
    _
  $region27: #{g_hypernet_forward.1} parent=0 // pred_check_branch
    %2175 = sbr.rel (0) target = $region29
  $region28: #{g_hypernet_forward.1} parent=0 // pred_region
    _
  $region29: #{g_hypernet_forward.1} parent=0 // pred_fallthru
    _

</llo_original>
